<compile_context>
chip_gen: v7x
topology: tpu7x:2x2x1
jax: 0.10.0
libtpu: 0.0.40
codegen_flags: <defaults>
</compile_context>

<pallas_src>
import functools
import math

import jax
import jax.numpy as jnp
from jax.experimental import pallas as pl
from jax.experimental.pallas import tpu as pltpu


_LANE = 128
_SPECTRAL_PAD_TILE = 512          # pad quantum for the flattened mode axis


# ---------------------------------------------------------------------------
# helpers
# ---------------------------------------------------------------------------
def _round_up(x, m):
    return ((x + m - 1) // m) * m


def _vmem_config():
    """(block_budget_bytes, vmem_limit_bytes), generation-aware.

    v5e/v6e have 128 MiB physical VMEM -> large blocks; v7x has 64 MiB per
    TensorCore -> keep the previous conservative budget."""
    try:
        cap = pltpu.get_tpu_info().vmem_capacity_bytes
    except Exception:
        cap = 64 * 1024 * 1024                      # conservative (v7x per-TC)
    vmem_limit = max(32 * 1024 * 1024,
                     min(cap - 16 * 1024 * 1024, 96 * 1024 * 1024))
    return vmem_limit // 2, vmem_limit


def _pick_divisor_tile(total, bytes_per_lane, budget, cap=2048):
    """Largest multiple of 128 that divides `total` (itself a multiple of 128),
    is <= cap, and keeps the block footprint (incl. temporaries, via
    bytes_per_lane) under `budget`."""
    best = _LANE
    t = 2 * _LANE
    while t <= min(cap, total):
        if total % t == 0 and t * bytes_per_lane <= budget:
            best = t
        t += _LANE
    return best


def _pick_cdiv_tile(total, bytes_per_lane, budget, cap=4096):
    """Largest multiple of 128 (<= total, <= cap) under `budget`.  Used with
    pl.cdiv grids; the tail block is handled by Pallas' masked boundary
    writeback, so no divisibility is required."""
    if total < _LANE:
        return total
    t = min(cap, (total // _LANE) * _LANE)
    while t > _LANE and t * bytes_per_lane > budget:
        t -= _LANE
    return max(t, _LANE)


# ---------------------------------------------------------------------------
# Pallas kernel 1: complex channel-mixing for the four spectral corners
# ---------------------------------------------------------------------------
def _spectral_mix_kernel(a_re_ref, a_im_ref, w_re_ref, w_im_ref,
                         o_re_ref, o_im_ref):
    # a_*: (B, Ci, tM)   w_*: (Ci, Co, tM)   o_*: (B*Co, tM)
    B, Ci, tM = a_re_ref.shape
    Co = w_re_ref.shape[1]

    def expand_a(v):
        # (B, tM) -> (B*Co, tM): row b repeated Co times (sublane broadcast +
        # concat; keeps the second-minor dim a full B*Co instead of B).
        parts = [jnp.broadcast_to(v[b:b + 1, :], (Co, tM)) for b in range(B)]
        return jnp.concatenate(parts, axis=0)

    def expand_w(v):
        # (Co, tM) -> (B*Co, tM): whole weight slab tiled B times.
        return jnp.concatenate([v] * B, axis=0)

    # Ci is small and static: unrolled Python loop with static sublane slices,
    # accumulating straight into the output refs (no fori carry / final copy).
    for i in range(Ci):
        ea_r = expand_a(a_re_ref[:, i, :])
        ea_i = expand_a(a_im_ref[:, i, :])
        ew_r = expand_w(w_re_ref[i])
        ew_i = expand_w(w_im_ref[i])
        # Gauss 3-multiply complex product on sublane-packed (B*Co, tM) tiles:
        #   k1 = wr*(ar+ai); k2 = ar*(wi-wr); k3 = ai*(wr+wi)
        #   re = k1 - k3 ; im = k1 + k2
        k1 = (ea_r + ea_i) * ew_r
        k2 = ea_r * (ew_i - ew_r)
        k3 = ea_i * (ew_r + ew_i)
        if i == 0:
            o_re_ref[...] = k1 - k3
            o_im_ref[...] = k1 + k2
        else:
            o_re_ref[...] += k1 - k3
            o_im_ref[...] += k1 + k2


def spectral_mix(a_re, a_im, w_re, w_im):
    # a_*: (4, B, Ci, Mp)   w_*: (4, Ci, Co, Mp)   ->   (4, B*Co, Mp) re/im
    ncorner, B, Ci, Mp = a_re.shape
    Co = w_re.shape[2]
    budget, vmem_limit = _vmem_config()

    # f32 bytes per lane-column: double-buffered re+im input/output blocks plus
    # the in-kernel Gauss temporaries (~8 packed (B*Co, tM) arrays live).
    bytes_per_lane = 4 * (4 * B * Ci + 4 * Ci * Co + 4 * B * Co + 8 * B * Co)
    tM = _pick_divisor_tile(Mp, bytes_per_lane, budget)
    num_m = Mp // tM

    if num_m > 1:
        grid = (num_m, ncorner)
        a_map = lambda m, n: (n, 0, 0, m)
        w_map = lambda m, n: (n, 0, 0, m)
        o_map = lambda m, n: (n, 0, m)
    else:
        # Put the always-4 corner axis first so the 2 TensorCores split 2/2.
        grid = (ncorner, num_m)
        a_map = lambda n, m: (n, 0, 0, m)
        w_map = lambda n, m: (n, 0, 0, m)
        o_map = lambda n, m: (n, 0, m)

    a_spec = pl.BlockSpec((None, B, Ci, tM), a_map)
    w_spec = pl.BlockSpec((None, Ci, Co, tM), w_map)
    o_spec = pl.BlockSpec((None, B * Co, tM), o_map)

    flops = 8 * ncorner * B * Co * Ci * Mp
    bytes_accessed = 4 * 2 * (a_re.size + w_re.size + ncorner * B * Co * Mp)
    out_shape = (jax.ShapeDtypeStruct((ncorner, B * Co, Mp), jnp.float32),
                 jax.ShapeDtypeStruct((ncorner, B * Co, Mp), jnp.float32))
    return pl.pallas_call(
        _spectral_mix_kernel,
        out_shape=out_shape,
        grid=grid,
        in_specs=[a_spec, a_spec, w_spec, w_spec],
        out_specs=(o_spec, o_spec),
        compiler_params=pltpu.CompilerParams(
            dimension_semantics=("parallel", "parallel"),
            vmem_limit_bytes=vmem_limit),
        cost_estimate=pl.CostEstimate(flops=int(flops), transcendentals=0,
                                      bytes_accessed=int(bytes_accessed)),
    )(a_re, a_im, w_re, w_im)


# ---------------------------------------------------------------------------
# Pallas kernel 2: fused ReLU + 1x1 Conv1d (pointwise channel matmul + bias)
# ---------------------------------------------------------------------------
def _relu_conv1x1_kernel(x_ref, w_ref, b_ref, o_ref, *, use_mxu):
    # x: (Cin, tN), w: (Cout, Cin), b: (Cout, 1), o: (Cout, tN)
    x = jnp.maximum(x_ref[...], 0.0)
    w = w_ref[...]
    if use_mxu:
        y = jnp.dot(w, x, preferred_element_type=jnp.float32)
    else:
        # Tiny C: unrolled VPU broadcast-MACs.  No (Cout, Cin, tN) temporary,
        # no cross-sublane reduction, no >90%-padded MXU tile.
        cin = x.shape[0]
        y = w[:, 0:1] * x[0:1, :]
        for i in range(1, cin):
            y = y + w[:, i:i + 1] * x[i:i + 1, :]
    o_ref[...] = y + b_ref[...]


def relu_conv1x1(x, w, b):
    # x: (B, C, N), w: (C, C), b: (C, 1)  ->  (B, C, N)
    # pl.cdiv grid over lane-dense N tiles; the partial tail tile (if any) is
    # dropped by Pallas' masked boundary writeback, so no wrapper pad/slice.
    B, C, N = x.shape
    budget, vmem_limit = _vmem_config()
    bytes_per_lane = 4 * (2 * C + 2 * C + 2 * C)   # x/out double-buffered + temps
    tN = _pick_cdiv_tile(N, bytes_per_lane, budget)
    num_n = pl.cdiv(N, tN)
    # Under-utilized MXU tile still keeps the op memory-bound (cheaper than a
    # VALU-bound VPU loop) once C reaches ~8.
    use_mxu = C >= 8

    if num_n > 1:
        grid = (num_n, B)
        x_map = lambda n, i: (i, 0, n)
        p_map = lambda n, i: (0, 0)
        o_map = lambda n, i: (i, 0, n)
    else:
        grid = (B, num_n)
        x_map = lambda i, n: (i, 0, n)
        p_map = lambda i, n: (0, 0)
        o_map = lambda i, n: (i, 0, n)

    kernel = functools.partial(_relu_conv1x1_kernel, use_mxu=use_mxu)
    flops = 2 * B * C * C * N
    bytes_accessed = 4 * (2 * x.size + w.size + b.size)
    return pl.pallas_call(
        kernel,
        out_shape=jax.ShapeDtypeStruct((B, C, N), jnp.float32),
        grid=grid,
        in_specs=[pl.BlockSpec((None, C, tN), x_map),
                  pl.BlockSpec((C, C), p_map),
                  pl.BlockSpec((C, 1), p_map)],
        out_specs=pl.BlockSpec((None, C, tN), o_map),
        compiler_params=pltpu.CompilerParams(
            dimension_semantics=("parallel", "parallel"),
            vmem_limit_bytes=vmem_limit),
        cost_estimate=pl.CostEstimate(flops=int(flops), transcendentals=0,
                                      bytes_accessed=int(bytes_accessed)),
    )(x, w, b)


# ---------------------------------------------------------------------------
# Weight preprocessing (hoisted out of the per-call forward)
# ---------------------------------------------------------------------------
def prepare_spectral_weights(w1, w2, w3, w4, modes, Nx, Ny, T):
    """Stack / corner-slice / flatten / pad the spectral weights ONCE.
    Returns (w_re, w_im) of shape (4, Ci, Co, Mp).  Mp is padded so that a
    large (>=512) lane tile always divides it (no silent 128-lane fallback)."""
    C = w1.shape[0]
    l1 = min(modes, Nx // 2 + 1)
    l2 = min(modes, Ny // 2 + 1)
    l3 = min(modes, T // 2 + 1)
    M = l1 * l2 * l3
    Mp = _round_up(M, _LANE)
    if Mp > _SPECTRAL_PAD_TILE:
        Mp = _round_up(M, _SPECTRAL_PAD_TILE)

    w_all = jnp.stack([w1, w2, w3, w4], axis=0)[:, :, :, :l1, :l2, :l3, :]
    w_all = w_all.reshape(4, C, C, M, 2)
    w_re = w_all[..., 0]
    w_im = w_all[..., 1]
    if Mp != M:
        pad = ((0, 0), (0, 0), (0, 0), (0, Mp - M))
        w_re = jnp.pad(w_re, pad)
        w_im = jnp.pad(w_im, pad)
    return w_re.astype(jnp.float32), w_im.astype(jnp.float32)


# ---------------------------------------------------------------------------
# Forward pass (glue in plain JAX, hot paths via the Pallas kernels above)
# ---------------------------------------------------------------------------
def sparse_kernel_ft_forward(x, w_re, w_im, lo_w, lo_b, modes):
    B, c, ich, Nx, Ny, T = x.shape
    C = c * ich
    xr = x.reshape(B, C, Nx, Ny, T)

    # TODO(synk): FFTs stay in XLA; no Pallas equivalent.
    xf = jnp.fft.rfftn(xr, axes=(-3, -2, -1))          # (B, C, Nx, Ny, T//2+1)
    l1 = min(modes, Nx // 2 + 1)
    l2 = min(modes, Ny // 2 + 1)
    l3 = min(modes, T // 2 + 1)
    Tf = T // 2 + 1
    M = l1 * l2 * l3
    Mp = w_re.shape[-1]                                 # padded mode axis

    # Four corner slices, same order as the PyTorch assignments.  Kept in the
    # natural (corner, B, Ci, M) layout: no swapaxes transpose copy.
    slabs = [
        xf[:, :, :l1, :l2, :l3],
        xf[:, :, Nx - l1:, :l2, :l3],
        xf[:, :, :l1, Ny - l2:, :l3],
        xf[:, :, Nx - l1:, Ny - l2:, :l3],
    ]
    a = jnp.stack(slabs, axis=0).reshape(4, B, C, M)
    a_re = jnp.real(a).astype(jnp.float32)
    a_im = jnp.imag(a).astype(jnp.float32)
    if Mp != M:
        pad = ((0, 0), (0, 0), (0, 0), (0, Mp - M))
        a_re = jnp.pad(a_re, pad)
        a_im = jnp.pad(a_im, pad)

    o_re, o_im = spectral_mix(a_re, a_im, w_re, w_im)   # (4, B*Co, Mp) each
    o_re = o_re.reshape(4, B, C, Mp)[..., :M]
    o_im = o_im.reshape(4, B, C, Mp)[..., :M]
    o = (o_re + 1j * o_im).astype(xf.dtype).reshape(4, B, C, l1, l2, l3)

    out_ft = jnp.zeros((B, C, Nx, Ny, Tf), dtype=xf.dtype)
    # Sequential .set() matches PyTorch's overwrite semantics if corners overlap.
    out_ft = out_ft.at[:, :, :l1, :l2, :l3].set(o[0])
    out_ft = out_ft.at[:, :, Nx - l1:, :l2, :l3].set(o[1])
    out_ft = out_ft.at[:, :, :l1, Ny - l2:, :l3].set(o[2])
    out_ft = out_ft.at[:, :, Nx - l1:, Ny - l2:, :l3].set(o[3])

    xo = jnp.fft.irfftn(out_ft, s=(Nx, Ny, T), axes=(-3, -2, -1))   # (B,C,Nx,Ny,T)

    # Fused ReLU + 1x1 conv on the flattened spatial axis (no pad round-trip).
    N = Nx * Ny * T
    y = relu_conv1x1(xo.reshape(B, C, N).astype(jnp.float32), lo_w, lo_b)
    return y.reshape(B, c, ich, Nx, Ny, T)


# ---------------------------------------------------------------------------
# Pure-JAX reference (for correctness checking)
# ---------------------------------------------------------------------------
def reference_forward(x, w1, w2, w3, w4, lo_w, lo_b, modes):
    B, c, ich, Nx, Ny, T = x.shape
    C = c * ich
    xr = x.reshape(B, C, Nx, Ny, T)
    xf = jnp.fft.rfftn(xr, axes=(-3, -2, -1))
    l1 = min(modes, Nx // 2 + 1)
    l2 = min(modes, Ny // 2 + 1)
    l3 = min(modes, T // 2 + 1)
    Tf = T // 2 + 1

    def cmul(a, w):
        wc = w[..., 0] + 1j * w[..., 1]
        return jnp.einsum('bixyz,ioxyz->boxyz', a, wc.astype(a.dtype))

    out = jnp.zeros((B, C, Nx, Ny, Tf), dtype=xf.dtype)
    out = out.at[:, :, :l1, :l2, :l3].set(
        cmul(xf[:, :, :l1, :l2, :l3], w1[:, :, :l1, :l2, :l3]))
    out = out.at[:, :, Nx - l1:, :l2, :l3].set(
        cmul(xf[:, :, Nx - l1:, :l2, :l3], w2[:, :, :l1, :l2, :l3]))
    out = out.at[:, :, :l1, Ny - l2:, :l3].set(
        cmul(xf[:, :, :l1, Ny - l2:, :l3], w3[:, :, :l1, :l2, :l3]))
    out = out.at[:, :, Nx - l1:, Ny - l2:, :l3].set(
        cmul(xf[:, :, Nx - l1:, Ny - l2:, :l3], w4[:, :, :l1, :l2, :l3]))

    xo = jnp.fft.irfftn(out, s=(Nx, Ny, T), axes=(-3, -2, -1))
    xo = jnp.maximum(xo, 0.0)
    y = jnp.einsum('oi,bin->bon', lo_w, xo.reshape(B, C, -1)) + lo_b
    return y.reshape(B, c, ich, Nx, Ny, T)


# ---------------------------------------------------------------------------
# Parameter construction (deterministic, mirrors module __init__ shapes)
# ---------------------------------------------------------------------------
def make_params(key, k, alpha, c):
    C = c * k ** 2
    modes = alpha
    wshape = (C, C, modes, modes, modes, 2)
    rf = modes * modes * modes * 2
    std = math.sqrt(2.0 / (C * rf + C * rf))        # xavier_normal_
    keys = jax.random.split(key, 6)
    w1 = std * jax.random.normal(keys[0], wshape, jnp.float32)
    w2 = std * jax.random.normal(keys[1], wshape, jnp.float32)
    w3 = std * jax.random.normal(keys[2], wshape, jnp.float32)
    w4 = std * jax.random.normal(keys[3], wshape, jnp.float32)
    bound = 1.0 / math.sqrt(C)
    lo_w = jax.random.uniform(keys[4], (C, C), jnp.float32, -bound, bound)
    lo_b = jax.random.uniform(keys[5], (C, 1), jnp.float32, -bound, bound)
    return w1, w2, w3, w4, lo_w, lo_b


if __name__ == "__main__":
    # Small shapes: k=2, c=1  ->  ich = k^2 = 4, C = c*k^2 = 4;  modes(alpha)=4
    B, c, k, alpha = 2, 1, 2, 4
    ich = k ** 2
    Nx, Ny, T = 8, 8, 8

    key = jax.random.PRNGKey(0)
    kx, kp = jax.random.split(key)
    x = jax.random.normal(kx, (B, c, ich, Nx, Ny, T), jnp.float32)
    w1, w2, w3, w4, lo_w, lo_b = make_params(kp, k, alpha, c)

    # Spectral weight preprocessing hoisted out of the per-call forward.
    w_re, w_im = prepare_spectral_weights(w1, w2, w3, w4, alpha, Nx, Ny, T)

    fwd = jax.jit(sparse_kernel_ft_forward, static_argnums=(5,))
    out = jax.block_until_ready(fwd(x, w_re, w_im, lo_w, lo_b, alpha))

    ref = jax.block_until_ready(
        reference_forward(x, w1, w2, w3, w4, lo_w, lo_b, alpha))

    assert out.shape == (B, c, ich, Nx, Ny, T), out.shape
    assert jnp.allclose(out, ref, atol=1e-4, rtol=1e-4), \
        float(jnp.max(jnp.abs(out - ref)))
    print("KERNEL_OK")
</pallas_src>

<mosaic_0001>
module attributes {stable_mosaic.version = 11 : i64} {
  func.func @_spectral_mix_kernel(%arg0: i32, %arg1: i32, %arg2: memref<1x2x4x128xf32, #tpu.memory_space<vmem>>, %arg3: memref<1x2x4x128xf32, #tpu.memory_space<vmem>>, %arg4: memref<1x4x4x128xf32, #tpu.memory_space<vmem>>, %arg5: memref<1x4x4x128xf32, #tpu.memory_space<vmem>>, %arg6: memref<1x8x128xf32, #tpu.memory_space<vmem>>, %arg7: memref<1x8x128xf32, #tpu.memory_space<vmem>>) attributes {dimension_semantics = [#tpu.dimension_semantics<parallel>, #tpu.dimension_semantics<parallel>], iteration_bounds = array<i64: 4, 1>, scalar_prefetch = 0 : i64, scratch_operands = 0 : i64, tpu.core_type = #tpu.core_type<tc>, window_params = [{transform_indices = @transform_0, window_bounds = array<i64: 1, 2, 4, 128>}, {transform_indices = @transform_1, window_bounds = array<i64: 1, 2, 4, 128>}, {transform_indices = @transform_2, window_bounds = array<i64: 1, 4, 4, 128>}, {transform_indices = @transform_3, window_bounds = array<i64: 1, 4, 4, 128>}, {transform_indices = @transform_4, window_bounds = array<i64: 1, 8, 128>}, {transform_indices = @transform_5, window_bounds = array<i64: 1, 8, 128>}]} {
    %c0 = arith.constant 0 : index
    %c0_0 = arith.constant 0 : index
    %c0_1 = arith.constant 0 : index
    %c0_2 = arith.constant 0 : index
    %0 = vector.load %arg2[%c0, %c0_0, %c0_1, %c0_2] : memref<1x2x4x128xf32, #tpu.memory_space<vmem>>, vector<1x2x1x128xf32>
    %1 = vector.shape_cast %0 : vector<1x2x1x128xf32> to vector<2x128xf32>
    %2 = vector.extract_strided_slice %1 {offsets = [0, 0], sizes = [1, 128], strides = [1, 1]} : vector<2x128xf32> to vector<1x128xf32>
    %3 = vector.shape_cast %2 : vector<1x128xf32> to vector<1x128xf32>
    %4 = vector.broadcast %3 : vector<1x128xf32> to vector<4x128xf32>
    %5 = vector.extract_strided_slice %1 {offsets = [1, 0], sizes = [1, 128], strides = [1, 1]} : vector<2x128xf32> to vector<1x128xf32>
    %6 = vector.shape_cast %5 : vector<1x128xf32> to vector<1x128xf32>
    %7 = vector.broadcast %6 : vector<1x128xf32> to vector<4x128xf32>
    %8 = tpu.concatenate %4, %7 in 0 : vector<4x128xf32>, vector<4x128xf32> -> vector<8x128xf32>
    %c0_3 = arith.constant 0 : index
    %c0_4 = arith.constant 0 : index
    %c0_5 = arith.constant 0 : index
    %c0_6 = arith.constant 0 : index
    %9 = vector.load %arg3[%c0_3, %c0_4, %c0_5, %c0_6] : memref<1x2x4x128xf32, #tpu.memory_space<vmem>>, vector<1x2x1x128xf32>
    %10 = vector.shape_cast %9 : vector<1x2x1x128xf32> to vector<2x128xf32>
    %11 = vector.extract_strided_slice %10 {offsets = [0, 0], sizes = [1, 128], strides = [1, 1]} : vector<2x128xf32> to vector<1x128xf32>
    %12 = vector.shape_cast %11 : vector<1x128xf32> to vector<1x128xf32>
    %13 = vector.broadcast %12 : vector<1x128xf32> to vector<4x128xf32>
    %14 = vector.extract_strided_slice %10 {offsets = [1, 0], sizes = [1, 128], strides = [1, 1]} : vector<2x128xf32> to vector<1x128xf32>
    %15 = vector.shape_cast %14 : vector<1x128xf32> to vector<1x128xf32>
    %16 = vector.broadcast %15 : vector<1x128xf32> to vector<4x128xf32>
    %17 = tpu.concatenate %13, %16 in 0 : vector<4x128xf32>, vector<4x128xf32> -> vector<8x128xf32>
    %c0_7 = arith.constant 0 : index
    %c0_8 = arith.constant 0 : index
    %c0_9 = arith.constant 0 : index
    %c0_10 = arith.constant 0 : index
    %18 = vector.load %arg4[%c0_7, %c0_8, %c0_9, %c0_10] : memref<1x4x4x128xf32, #tpu.memory_space<vmem>>, vector<1x1x4x128xf32>
    %19 = vector.shape_cast %18 : vector<1x1x4x128xf32> to vector<4x128xf32>
    %20 = tpu.concatenate %19, %19 in 0 : vector<4x128xf32>, vector<4x128xf32> -> vector<8x128xf32>
    %c0_11 = arith.constant 0 : index
    %c0_12 = arith.constant 0 : index
    %c0_13 = arith.constant 0 : index
    %c0_14 = arith.constant 0 : index
    %21 = vector.load %arg5[%c0_11, %c0_12, %c0_13, %c0_14] : memref<1x4x4x128xf32, #tpu.memory_space<vmem>>, vector<1x1x4x128xf32>
    %22 = vector.shape_cast %21 : vector<1x1x4x128xf32> to vector<4x128xf32>
    %23 = tpu.concatenate %22, %22 in 0 : vector<4x128xf32>, vector<4x128xf32> -> vector<8x128xf32>
    %24 = arith.addf %8, %17 : vector<8x128xf32>
    %25 = arith.mulf %24, %20 : vector<8x128xf32>
    %26 = arith.subf %23, %20 : vector<8x128xf32>
    %27 = arith.mulf %8, %26 : vector<8x128xf32>
    %28 = arith.addf %20, %23 : vector<8x128xf32>
    %29 = arith.mulf %17, %28 : vector<8x128xf32>
    %30 = arith.subf %25, %29 : vector<8x128xf32>
    %c0_15 = arith.constant 0 : index
    %c0_16 = arith.constant 0 : index
    %c0_17 = arith.constant 0 : index
    %31 = vector.load %arg6[%c0_15, %c0_16, %c0_17] : memref<1x8x128xf32, #tpu.memory_space<vmem>>, vector<1x8x128xf32>
    %32 = vector.shape_cast %31 : vector<1x8x128xf32> to vector<8x128xf32>
    %33 = vector.shape_cast %30 : vector<8x128xf32> to vector<1x8x128xf32>
    tpu.vector_store %arg6[%c0_15, %c0_16, %c0_17], %33 {strides = array<i32>} : memref<1x8x128xf32, #tpu.memory_space<vmem>>, vector<1x8x128xf32>,
    %34 = arith.addf %25, %27 : vector<8x128xf32>
    %c0_18 = arith.constant 0 : index
    %c0_19 = arith.constant 0 : index
    %c0_20 = arith.constant 0 : index
    %35 = vector.load %arg7[%c0_18, %c0_19, %c0_20] : memref<1x8x128xf32, #tpu.memory_space<vmem>>, vector<1x8x128xf32>
    %36 = vector.shape_cast %35 : vector<1x8x128xf32> to vector<8x128xf32>
    %37 = vector.shape_cast %34 : vector<8x128xf32> to vector<1x8x128xf32>
    tpu.vector_store %arg7[%c0_18, %c0_19, %c0_20], %37 {strides = array<i32>} : memref<1x8x128xf32, #tpu.memory_space<vmem>>, vector<1x8x128xf32>,
    %c0_21 = arith.constant 0 : index
    %c0_22 = arith.constant 0 : index
    %c1 = arith.constant 1 : index
    %c0_23 = arith.constant 0 : index
    %38 = vector.load %arg2[%c0_21, %c0_22, %c1, %c0_23] : memref<1x2x4x128xf32, #tpu.memory_space<vmem>>, vector<1x2x1x128xf32>
    %39 = vector.shape_cast %38 : vector<1x2x1x128xf32> to vector<2x128xf32>
    %40 = vector.extract_strided_slice %39 {offsets = [0, 0], sizes = [1, 128], strides = [1, 1]} : vector<2x128xf32> to vector<1x128xf32>
    %41 = vector.shape_cast %40 : vector<1x128xf32> to vector<1x128xf32>
    %42 = vector.broadcast %41 : vector<1x128xf32> to vector<4x128xf32>
    %43 = vector.extract_strided_slice %39 {offsets = [1, 0], sizes = [1, 128], strides = [1, 1]} : vector<2x128xf32> to vector<1x128xf32>
    %44 = vector.shape_cast %43 : vector<1x128xf32> to vector<1x128xf32>
    %45 = vector.broadcast %44 : vector<1x128xf32> to vector<4x128xf32>
    %46 = tpu.concatenate %42, %45 in 0 : vector<4x128xf32>, vector<4x128xf32> -> vector<8x128xf32>
    %c0_24 = arith.constant 0 : index
    %c0_25 = arith.constant 0 : index
    %c1_26 = arith.constant 1 : index
    %c0_27 = arith.constant 0 : index
    %47 = vector.load %arg3[%c0_24, %c0_25, %c1_26, %c0_27] : memref<1x2x4x128xf32, #tpu.memory_space<vmem>>, vector<1x2x1x128xf32>
    %48 = vector.shape_cast %47 : vector<1x2x1x128xf32> to vector<2x128xf32>
    %49 = vector.extract_strided_slice %48 {offsets = [0, 0], sizes = [1, 128], strides = [1, 1]} : vector<2x128xf32> to vector<1x128xf32>
    %50 = vector.shape_cast %49 : vector<1x128xf32> to vector<1x128xf32>
    %51 = vector.broadcast %50 : vector<1x128xf32> to vector<4x128xf32>
    %52 = vector.extract_strided_slice %48 {offsets = [1, 0], sizes = [1, 128], strides = [1, 1]} : vector<2x128xf32> to vector<1x128xf32>
    %53 = vector.shape_cast %52 : vector<1x128xf32> to vector<1x128xf32>
    %54 = vector.broadcast %53 : vector<1x128xf32> to vector<4x128xf32>
    %55 = tpu.concatenate %51, %54 in 0 : vector<4x128xf32>, vector<4x128xf32> -> vector<8x128xf32>
    %c0_28 = arith.constant 0 : index
    %c1_29 = arith.constant 1 : index
    %c0_30 = arith.constant 0 : index
    %c0_31 = arith.constant 0 : index
    %56 = vector.load %arg4[%c0_28, %c1_29, %c0_30, %c0_31] : memref<1x4x4x128xf32, #tpu.memory_space<vmem>>, vector<1x1x4x128xf32>
    %57 = vector.shape_cast %56 : vector<1x1x4x128xf32> to vector<4x128xf32>
    %58 = tpu.concatenate %57, %57 in 0 : vector<4x128xf32>, vector<4x128xf32> -> vector<8x128xf32>
    %c0_32 = arith.constant 0 : index
    %c1_33 = arith.constant 1 : index
    %c0_34 = arith.constant 0 : index
    %c0_35 = arith.constant 0 : index
    %59 = vector.load %arg5[%c0_32, %c1_33, %c0_34, %c0_35] : memref<1x4x4x128xf32, #tpu.memory_space<vmem>>, vector<1x1x4x128xf32>
    %60 = vector.shape_cast %59 : vector<1x1x4x128xf32> to vector<4x128xf32>
    %61 = tpu.concatenate %60, %60 in 0 : vector<4x128xf32>, vector<4x128xf32> -> vector<8x128xf32>
    %62 = arith.addf %46, %55 : vector<8x128xf32>
    %63 = arith.mulf %62, %58 : vector<8x128xf32>
    %64 = arith.subf %61, %58 : vector<8x128xf32>
    %65 = arith.mulf %46, %64 : vector<8x128xf32>
    %66 = arith.addf %58, %61 : vector<8x128xf32>
    %67 = arith.mulf %55, %66 : vector<8x128xf32>
    %c0_36 = arith.constant 0 : index
    %c0_37 = arith.constant 0 : index
    %c0_38 = arith.constant 0 : index
    %68 = vector.load %arg6[%c0_36, %c0_37, %c0_38] : memref<1x8x128xf32, #tpu.memory_space<vmem>>, vector<1x8x128xf32>
    %69 = vector.shape_cast %68 : vector<1x8x128xf32> to vector<8x128xf32>
    %70 = arith.subf %63, %67 : vector<8x128xf32>
    %71 = arith.addf %69, %70 : vector<8x128xf32>
    %c0_39 = arith.constant 0 : index
    %c0_40 = arith.constant 0 : index
    %c0_41 = arith.constant 0 : index
    %72 = vector.load %arg6[%c0_39, %c0_40, %c0_41] : memref<1x8x128xf32, #tpu.memory_space<vmem>>, vector<1x8x128xf32>
    %73 = vector.shape_cast %72 : vector<1x8x128xf32> to vector<8x128xf32>
    %74 = vector.shape_cast %71 : vector<8x128xf32> to vector<1x8x128xf32>
    tpu.vector_store %arg6[%c0_39, %c0_40, %c0_41], %74 {strides = array<i32>} : memref<1x8x128xf32, #tpu.memory_space<vmem>>, vector<1x8x128xf32>,
    %c0_42 = arith.constant 0 : index
    %c0_43 = arith.constant 0 : index
    %c0_44 = arith.constant 0 : index
    %75 = vector.load %arg7[%c0_42, %c0_43, %c0_44] : memref<1x8x128xf32, #tpu.memory_space<vmem>>, vector<1x8x128xf32>
    %76 = vector.shape_cast %75 : vector<1x8x128xf32> to vector<8x128xf32>
    %77 = arith.addf %63, %65 : vector<8x128xf32>
    %78 = arith.addf %76, %77 : vector<8x128xf32>
    %c0_45 = arith.constant 0 : index
    %c0_46 = arith.constant 0 : index
    %c0_47 = arith.constant 0 : index
    %79 = vector.load %arg7[%c0_45, %c0_46, %c0_47] : memref<1x8x128xf32, #tpu.memory_space<vmem>>, vector<1x8x128xf32>
    %80 = vector.shape_cast %79 : vector<1x8x128xf32> to vector<8x128xf32>
    %81 = vector.shape_cast %78 : vector<8x128xf32> to vector<1x8x128xf32>
    tpu.vector_store %arg7[%c0_45, %c0_46, %c0_47], %81 {strides = array<i32>} : memref<1x8x128xf32, #tpu.memory_space<vmem>>, vector<1x8x128xf32>,
    %c0_48 = arith.constant 0 : index
    %c0_49 = arith.constant 0 : index
    %c2 = arith.constant 2 : index
    %c0_50 = arith.constant 0 : index
    %82 = vector.load %arg2[%c0_48, %c0_49, %c2, %c0_50] : memref<1x2x4x128xf32, #tpu.memory_space<vmem>>, vector<1x2x1x128xf32>
    %83 = vector.shape_cast %82 : vector<1x2x1x128xf32> to vector<2x128xf32>
    %84 = vector.extract_strided_slice %83 {offsets = [0, 0], sizes = [1, 128], strides = [1, 1]} : vector<2x128xf32> to vector<1x128xf32>
    %85 = vector.shape_cast %84 : vector<1x128xf32> to vector<1x128xf32>
    %86 = vector.broadcast %85 : vector<1x128xf32> to vector<4x128xf32>
    %87 = vector.extract_strided_slice %83 {offsets = [1, 0], sizes = [1, 128], strides = [1, 1]} : vector<2x128xf32> to vector<1x128xf32>
    %88 = vector.shape_cast %87 : vector<1x128xf32> to vector<1x128xf32>
    %89 = vector.broadcast %88 : vector<1x128xf32> to vector<4x128xf32>
    %90 = tpu.concatenate %86, %89 in 0 : vector<4x128xf32>, vector<4x128xf32> -> vector<8x128xf32>
    %c0_51 = arith.constant 0 : index
    %c0_52 = arith.constant 0 : index
    %c2_53 = arith.constant 2 : index
    %c0_54 = arith.constant 0 : index
    %91 = vector.load %arg3[%c0_51, %c0_52, %c2_53, %c0_54] : memref<1x2x4x128xf32, #tpu.memory_space<vmem>>, vector<1x2x1x128xf32>
    %92 = vector.shape_cast %91 : vector<1x2x1x128xf32> to vector<2x128xf32>
    %93 = vector.extract_strided_slice %92 {offsets = [0, 0], sizes = [1, 128], strides = [1, 1]} : vector<2x128xf32> to vector<1x128xf32>
    %94 = vector.shape_cast %93 : vector<1x128xf32> to vector<1x128xf32>
    %95 = vector.broadcast %94 : vector<1x128xf32> to vector<4x128xf32>
    %96 = vector.extract_strided_slice %92 {offsets = [1, 0], sizes = [1, 128], strides = [1, 1]} : vector<2x128xf32> to vector<1x128xf32>
    %97 = vector.shape_cast %96 : vector<1x128xf32> to vector<1x128xf32>
    %98 = vector.broadcast %97 : vector<1x128xf32> to vector<4x128xf32>
    %99 = tpu.concatenate %95, %98 in 0 : vector<4x128xf32>, vector<4x128xf32> -> vector<8x128xf32>
    %c0_55 = arith.constant 0 : index
    %c2_56 = arith.constant 2 : index
    %c0_57 = arith.constant 0 : index
    %c0_58 = arith.constant 0 : index
    %100 = vector.load %arg4[%c0_55, %c2_56, %c0_57, %c0_58] : memref<1x4x4x128xf32, #tpu.memory_space<vmem>>, vector<1x1x4x128xf32>
    %101 = vector.shape_cast %100 : vector<1x1x4x128xf32> to vector<4x128xf32>
    %102 = tpu.concatenate %101, %101 in 0 : vector<4x128xf32>, vector<4x128xf32> -> vector<8x128xf32>
    %c0_59 = arith.constant 0 : index
    %c2_60 = arith.constant 2 : index
    %c0_61 = arith.constant 0 : index
    %c0_62 = arith.constant 0 : index
    %103 = vector.load %arg5[%c0_59, %c2_60, %c0_61, %c0_62] : memref<1x4x4x128xf32, #tpu.memory_space<vmem>>, vector<1x1x4x128xf32>
    %104 = vector.shape_cast %103 : vector<1x1x4x128xf32> to vector<4x128xf32>
    %105 = tpu.concatenate %104, %104 in 0 : vector<4x128xf32>, vector<4x128xf32> -> vector<8x128xf32>
    %106 = arith.addf %90, %99 : vector<8x128xf32>
    %107 = arith.mulf %106, %102 : vector<8x128xf32>
    %108 = arith.subf %105, %102 : vector<8x128xf32>
    %109 = arith.mulf %90, %108 : vector<8x128xf32>
    %110 = arith.addf %102, %105 : vector<8x128xf32>
    %111 = arith.mulf %99, %110 : vector<8x128xf32>
    %c0_63 = arith.constant 0 : index
    %c0_64 = arith.constant 0 : index
    %c0_65 = arith.constant 0 : index
    %112 = vector.load %arg6[%c0_63, %c0_64, %c0_65] : memref<1x8x128xf32, #tpu.memory_space<vmem>>, vector<1x8x128xf32>
    %113 = vector.shape_cast %112 : vector<1x8x128xf32> to vector<8x128xf32>
    %114 = arith.subf %107, %111 : vector<8x128xf32>
    %115 = arith.addf %113, %114 : vector<8x128xf32>
    %c0_66 = arith.constant 0 : index
    %c0_67 = arith.constant 0 : index
    %c0_68 = arith.constant 0 : index
    %116 = vector.load %arg6[%c0_66, %c0_67, %c0_68] : memref<1x8x128xf32, #tpu.memory_space<vmem>>, vector<1x8x128xf32>
    %117 = vector.shape_cast %116 : vector<1x8x128xf32> to vector<8x128xf32>
    %118 = vector.shape_cast %115 : vector<8x128xf32> to vector<1x8x128xf32>
    tpu.vector_store %arg6[%c0_66, %c0_67, %c0_68], %118 {strides = array<i32>} : memref<1x8x128xf32, #tpu.memory_space<vmem>>, vector<1x8x128xf32>,
    %c0_69 = arith.constant 0 : index
    %c0_70 = arith.constant 0 : index
    %c0_71 = arith.constant 0 : index
    %119 = vector.load %arg7[%c0_69, %c0_70, %c0_71] : memref<1x8x128xf32, #tpu.memory_space<vmem>>, vector<1x8x128xf32>
    %120 = vector.shape_cast %119 : vector<1x8x128xf32> to vector<8x128xf32>
    %121 = arith.addf %107, %109 : vector<8x128xf32>
    %122 = arith.addf %120, %121 : vector<8x128xf32>
    %c0_72 = arith.constant 0 : index
    %c0_73 = arith.constant 0 : index
    %c0_74 = arith.constant 0 : index
    %123 = vector.load %arg7[%c0_72, %c0_73, %c0_74] : memref<1x8x128xf32, #tpu.memory_space<vmem>>, vector<1x8x128xf32>
    %124 = vector.shape_cast %123 : vector<1x8x128xf32> to vector<8x128xf32>
    %125 = vector.shape_cast %122 : vector<8x128xf32> to vector<1x8x128xf32>
    tpu.vector_store %arg7[%c0_72, %c0_73, %c0_74], %125 {strides = array<i32>} : memref<1x8x128xf32, #tpu.memory_space<vmem>>, vector<1x8x128xf32>,
    %c0_75 = arith.constant 0 : index
    %c0_76 = arith.constant 0 : index
    %c3 = arith.constant 3 : index
    %c0_77 = arith.constant 0 : index
    %126 = vector.load %arg2[%c0_75, %c0_76, %c3, %c0_77] : memref<1x2x4x128xf32, #tpu.memory_space<vmem>>, vector<1x2x1x128xf32>
    %127 = vector.shape_cast %126 : vector<1x2x1x128xf32> to vector<2x128xf32>
    %128 = vector.extract_strided_slice %127 {offsets = [0, 0], sizes = [1, 128], strides = [1, 1]} : vector<2x128xf32> to vector<1x128xf32>
    %129 = vector.shape_cast %128 : vector<1x128xf32> to vector<1x128xf32>
    %130 = vector.broadcast %129 : vector<1x128xf32> to vector<4x128xf32>
    %131 = vector.extract_strided_slice %127 {offsets = [1, 0], sizes = [1, 128], strides = [1, 1]} : vector<2x128xf32> to vector<1x128xf32>
    %132 = vector.shape_cast %131 : vector<1x128xf32> to vector<1x128xf32>
    %133 = vector.broadcast %132 : vector<1x128xf32> to vector<4x128xf32>
    %134 = tpu.concatenate %130, %133 in 0 : vector<4x128xf32>, vector<4x128xf32> -> vector<8x128xf32>
    %c0_78 = arith.constant 0 : index
    %c0_79 = arith.constant 0 : index
    %c3_80 = arith.constant 3 : index
    %c0_81 = arith.constant 0 : index
    %135 = vector.load %arg3[%c0_78, %c0_79, %c3_80, %c0_81] : memref<1x2x4x128xf32, #tpu.memory_space<vmem>>, vector<1x2x1x128xf32>
    %136 = vector.shape_cast %135 : vector<1x2x1x128xf32> to vector<2x128xf32>
    %137 = vector.extract_strided_slice %136 {offsets = [0, 0], sizes = [1, 128], strides = [1, 1]} : vector<2x128xf32> to vector<1x128xf32>
    %138 = vector.shape_cast %137 : vector<1x128xf32> to vector<1x128xf32>
    %139 = vector.broadcast %138 : vector<1x128xf32> to vector<4x128xf32>
    %140 = vector.extract_strided_slice %136 {offsets = [1, 0], sizes = [1, 128], strides = [1, 1]} : vector<2x128xf32> to vector<1x128xf32>
    %141 = vector.shape_cast %140 : vector<1x128xf32> to vector<1x128xf32>
    %142 = vector.broadcast %141 : vector<1x128xf32> to vector<4x128xf32>
    %143 = tpu.concatenate %139, %142 in 0 : vector<4x128xf32>, vector<4x128xf32> -> vector<8x128xf32>
    %c0_82 = arith.constant 0 : index
    %c3_83 = arith.constant 3 : index
    %c0_84 = arith.constant 0 : index
    %c0_85 = arith.constant 0 : index
    %144 = vector.load %arg4[%c0_82, %c3_83, %c0_84, %c0_85] : memref<1x4x4x128xf32, #tpu.memory_space<vmem>>, vector<1x1x4x128xf32>
    %145 = vector.shape_cast %144 : vector<1x1x4x128xf32> to vector<4x128xf32>
    %146 = tpu.concatenate %145, %145 in 0 : vector<4x128xf32>, vector<4x128xf32> -> vector<8x128xf32>
    %c0_86 = arith.constant 0 : index
    %c3_87 = arith.constant 3 : index
    %c0_88 = arith.constant 0 : index
    %c0_89 = arith.constant 0 : index
    %147 = vector.load %arg5[%c0_86, %c3_87, %c0_88, %c0_89] : memref<1x4x4x128xf32, #tpu.memory_space<vmem>>, vector<1x1x4x128xf32>
    %148 = vector.shape_cast %147 : vector<1x1x4x128xf32> to vector<4x128xf32>
    %149 = tpu.concatenate %148, %148 in 0 : vector<4x128xf32>, vector<4x128xf32> -> vector<8x128xf32>
    %150 = arith.addf %134, %143 : vector<8x128xf32>
    %151 = arith.mulf %150, %146 : vector<8x128xf32>
    %152 = arith.subf %149, %146 : vector<8x128xf32>
    %153 = arith.mulf %134, %152 : vector<8x128xf32>
    %154 = arith.addf %146, %149 : vector<8x128xf32>
    %155 = arith.mulf %143, %154 : vector<8x128xf32>
    %c0_90 = arith.constant 0 : index
    %c0_91 = arith.constant 0 : index
    %c0_92 = arith.constant 0 : index
    %156 = vector.load %arg6[%c0_90, %c0_91, %c0_92] : memref<1x8x128xf32, #tpu.memory_space<vmem>>, vector<1x8x128xf32>
    %157 = vector.shape_cast %156 : vector<1x8x128xf32> to vector<8x128xf32>
    %158 = arith.subf %151, %155 : vector<8x128xf32>
    %159 = arith.addf %157, %158 : vector<8x128xf32>
    %c0_93 = arith.constant 0 : index
    %c0_94 = arith.constant 0 : index
    %c0_95 = arith.constant 0 : index
    %160 = vector.load %arg6[%c0_93, %c0_94, %c0_95] : memref<1x8x128xf32, #tpu.memory_space<vmem>>, vector<1x8x128xf32>
    %161 = vector.shape_cast %160 : vector<1x8x128xf32> to vector<8x128xf32>
    %162 = vector.shape_cast %159 : vector<8x128xf32> to vector<1x8x128xf32>
    tpu.vector_store %arg6[%c0_93, %c0_94, %c0_95], %162 {strides = array<i32>} : memref<1x8x128xf32, #tpu.memory_space<vmem>>, vector<1x8x128xf32>,
    %c0_96 = arith.constant 0 : index
    %c0_97 = arith.constant 0 : index
    %c0_98 = arith.constant 0 : index
    %163 = vector.load %arg7[%c0_96, %c0_97, %c0_98] : memref<1x8x128xf32, #tpu.memory_space<vmem>>, vector<1x8x128xf32>
    %164 = vector.shape_cast %163 : vector<1x8x128xf32> to vector<8x128xf32>
    %165 = arith.addf %151, %153 : vector<8x128xf32>
    %166 = arith.addf %164, %165 : vector<8x128xf32>
    %c0_99 = arith.constant 0 : index
    %c0_100 = arith.constant 0 : index
    %c0_101 = arith.constant 0 : index
    %167 = vector.load %arg7[%c0_99, %c0_100, %c0_101] : memref<1x8x128xf32, #tpu.memory_space<vmem>>, vector<1x8x128xf32>
    %168 = vector.shape_cast %167 : vector<1x8x128xf32> to vector<8x128xf32>
    %169 = vector.shape_cast %166 : vector<8x128xf32> to vector<1x8x128xf32>
    tpu.vector_store %arg7[%c0_99, %c0_100, %c0_101], %169 {strides = array<i32>} : memref<1x8x128xf32, #tpu.memory_space<vmem>>, vector<1x8x128xf32>,
    return
  }
  func.func @transform_0(%arg0: i32, %arg1: i32) -> (i32, i32, i32, i32) {
    %c0_i32 = arith.constant 0 : i32
    %c0_i32_0 = arith.constant 0 : i32
    %c0_i32_1 = arith.constant 0 : i32
    return %arg0, %c0_i32, %c0_i32_0, %arg1 : i32, i32, i32, i32
  }
  func.func @transform_1(%arg0: i32, %arg1: i32) -> (i32, i32, i32, i32) {
    %c0_i32 = arith.constant 0 : i32
    %c0_i32_0 = arith.constant 0 : i32
    %c0_i32_1 = arith.constant 0 : i32
    return %arg0, %c0_i32, %c0_i32_0, %arg1 : i32, i32, i32, i32
  }
  func.func @transform_2(%arg0: i32, %arg1: i32) -> (i32, i32, i32, i32) {
    %c0_i32 = arith.constant 0 : i32
    %c0_i32_0 = arith.constant 0 : i32
    %c0_i32_1 = arith.constant 0 : i32
    return %arg0, %c0_i32, %c0_i32_0, %arg1 : i32, i32, i32, i32
  }
  func.func @transform_3(%arg0: i32, %arg1: i32) -> (i32, i32, i32, i32) {
    %c0_i32 = arith.constant 0 : i32
    %c0_i32_0 = arith.constant 0 : i32
    %c0_i32_1 = arith.constant 0 : i32
    return %arg0, %c0_i32, %c0_i32_0, %arg1 : i32, i32, i32, i32
  }
  func.func @transform_4(%arg0: i32, %arg1: i32) -> (i32, i32, i32) {
    %c0_i32 = arith.constant 0 : i32
    %c0_i32_0 = arith.constant 0 : i32
    return %arg0, %c0_i32, %arg1 : i32, i32, i32
  }
  func.func @transform_5(%arg0: i32, %arg1: i32) -> (i32, i32, i32) {
    %c0_i32 = arith.constant 0 : i32
    %c0_i32_0 = arith.constant 0 : i32
    return %arg0, %c0_i32, %arg1 : i32, i32, i32
  }
}

module attributes {stable_mosaic.version = 11 : i64} {
  func.func @_relu_conv1x1_kernel(%arg0: i32, %arg1: i32, %arg2: memref<1x4x512xf32, #tpu.memory_space<vmem>>, %arg3: memref<4x4xf32, #tpu.memory_space<vmem>>, %arg4: memref<4x1xf32, #tpu.memory_space<vmem>>, %arg5: memref<1x4x512xf32, #tpu.memory_space<vmem>>) attributes {dimension_semantics = [#tpu.dimension_semantics<parallel>, #tpu.dimension_semantics<parallel>], iteration_bounds = array<i64: 2, 1>, scalar_prefetch = 0 : i64, scratch_operands = 0 : i64, tpu.core_type = #tpu.core_type<tc>, window_params = [{transform_indices = @transform_0, window_bounds = array<i64: 1, 4, 512>}, {pipeline_mode = #tpu.pipeline_mode<synchronous>, transform_indices = @transform_1, window_bounds = array<i64: 4, 4>}, {pipeline_mode = #tpu.pipeline_mode<synchronous>, transform_indices = @transform_2, window_bounds = array<i64: 4, 1>}, {transform_indices = @transform_3, window_bounds = array<i64: 1, 4, 512>}]} {
    %c0 = arith.constant 0 : index
    %c0_0 = arith.constant 0 : index
    %c0_1 = arith.constant 0 : index
    %0 = vector.load %arg2[%c0, %c0_0, %c0_1] : memref<1x4x512xf32, #tpu.memory_space<vmem>>, vector<1x4x512xf32>
    %1 = vector.shape_cast %0 : vector<1x4x512xf32> to vector<4x512xf32>
    %cst = arith.constant 0.000000e+00 : f32
    %2 = vector.broadcast %cst : f32 to vector<4x512xf32>
    %3 = arith.maximumf %1, %2 : vector<4x512xf32>
    %c0_2 = arith.constant 0 : index
    %c0_3 = arith.constant 0 : index
    %4 = vector.load %arg3[%c0_2, %c0_3] : memref<4x4xf32, #tpu.memory_space<vmem>>, vector<4x4xf32>
    %5 = vector.extract_strided_slice %4 {offsets = [0, 0], sizes = [4, 1], strides = [1, 1]} : vector<4x4xf32> to vector<4x1xf32>
    %6 = vector.extract_strided_slice %3 {offsets = [0, 0], sizes = [1, 512], strides = [1, 1]} : vector<4x512xf32> to vector<1x512xf32>
    %7 = vector.broadcast %5 : vector<4x1xf32> to vector<4x512xf32>
    %8 = vector.broadcast %6 : vector<1x512xf32> to vector<4x512xf32>
    %9 = arith.mulf %7, %8 : vector<4x512xf32>
    %10 = vector.extract_strided_slice %4 {offsets = [0, 1], sizes = [4, 1], strides = [1, 1]} : vector<4x4xf32> to vector<4x1xf32>
    %11 = vector.extract_strided_slice %3 {offsets = [1, 0], sizes = [1, 512], strides = [1, 1]} : vector<4x512xf32> to vector<1x512xf32>
    %12 = vector.broadcast %10 : vector<4x1xf32> to vector<4x512xf32>
    %13 = vector.broadcast %11 : vector<1x512xf32> to vector<4x512xf32>
    %14 = arith.mulf %12, %13 : vector<4x512xf32>
    %15 = arith.addf %9, %14 : vector<4x512xf32>
    %16 = vector.extract_strided_slice %4 {offsets = [0, 2], sizes = [4, 1], strides = [1, 1]} : vector<4x4xf32> to vector<4x1xf32>
    %17 = vector.extract_strided_slice %3 {offsets = [2, 0], sizes = [1, 512], strides = [1, 1]} : vector<4x512xf32> to vector<1x512xf32>
    %18 = vector.broadcast %16 : vector<4x1xf32> to vector<4x512xf32>
    %19 = vector.broadcast %17 : vector<1x512xf32> to vector<4x512xf32>
    %20 = arith.mulf %18, %19 : vector<4x512xf32>
    %21 = arith.addf %15, %20 : vector<4x512xf32>
    %22 = vector.extract_strided_slice %4 {offsets = [0, 3], sizes = [4, 1], strides = [1, 1]} : vector<4x4xf32> to vector<4x1xf32>
    %23 = vector.extract_strided_slice %3 {offsets = [3, 0], sizes = [1, 512], strides = [1, 1]} : vector<4x512xf32> to vector<1x512xf32>
    %24 = vector.broadcast %22 : vector<4x1xf32> to vector<4x512xf32>
    %25 = vector.broadcast %23 : vector<1x512xf32> to vector<4x512xf32>
    %26 = arith.mulf %24, %25 : vector<4x512xf32>
    %27 = arith.addf %21, %26 : vector<4x512xf32>
    %c0_4 = arith.constant 0 : index
    %c0_5 = arith.constant 0 : index
    %28 = vector.load %arg4[%c0_4, %c0_5] : memref<4x1xf32, #tpu.memory_space<vmem>>, vector<4x1xf32>
    %29 = vector.broadcast %28 : vector<4x1xf32> to vector<4x512xf32>
    %30 = arith.addf %27, %29 : vector<4x512xf32>
    %c0_6 = arith.constant 0 : index
    %c0_7 = arith.constant 0 : index
    %c0_8 = arith.constant 0 : index
    %31 = vector.load %arg5[%c0_6, %c0_7, %c0_8] : memref<1x4x512xf32, #tpu.memory_space<vmem>>, vector<1x4x512xf32>
    %32 = vector.shape_cast %31 : vector<1x4x512xf32> to vector<4x512xf32>
    %33 = vector.shape_cast %30 : vector<4x512xf32> to vector<1x4x512xf32>
    tpu.vector_store %arg5[%c0_6, %c0_7, %c0_8], %33 {strides = array<i32>} : memref<1x4x512xf32, #tpu.memory_space<vmem>>, vector<1x4x512xf32>,
    return
  }
  func.func @transform_0(%arg0: i32, %arg1: i32) -> (i32, i32, i32) {
    %c0_i32 = arith.constant 0 : i32
    %c0_i32_0 = arith.constant 0 : i32
    return %arg0, %c0_i32, %arg1 : i32, i32, i32
  }
  func.func @transform_1(%arg0: i32, %arg1: i32) -> (i32, i32) {
    %c0_i32 = arith.constant 0 : i32
    %c0_i32_0 = arith.constant 0 : i32
    %c0_i32_1 = arith.constant 0 : i32
    return %c0_i32, %c0_i32_0 : i32, i32
  }
  func.func @transform_2(%arg0: i32, %arg1: i32) -> (i32, i32) {
    %c0_i32 = arith.constant 0 : i32
    %c0_i32_0 = arith.constant 0 : i32
    %c0_i32_1 = arith.constant 0 : i32
    return %c0_i32, %c0_i32_0 : i32, i32
  }
  func.func @transform_3(%arg0: i32, %arg1: i32) -> (i32, i32, i32) {
    %c0_i32 = arith.constant 0 : i32
    %c0_i32_0 = arith.constant 0 : i32
    return %arg0, %c0_i32, %arg1 : i32, i32, i32
  }
}

</mosaic_0001>

<llo_original>
// kernel: sparse_kernel_ft_forward.2
$region0: #{sparse_kernel_ft_forward.2}
  #allocation0 [shape = 'u32[]', space=smem, size = 0x4, offset = 0x4, fixed_abs, tag = 'smem constant byte address 0x4 - core index']
  #allocation1 [shape = 'u32[144,128]{1,0:T(1,128)}', space=vmem, size = 0x12000, scoped, tag = 'internal scratch']
  %s0 = inlined_call_operand.vmem [shape: f32[4,2,4,128], index: 0, kind: input, shape index: {}]
  %s1 = inlined_call_operand.vmem [shape: f32[4,2,4,128], index: 1, kind: input, shape index: {}]
  %s2 = inlined_call_operand.vmem [shape: f32[4,4,4,128], index: 2, kind: input, shape index: {}]
  %s3 = inlined_call_operand.vmem [shape: f32[4,4,4,128], index: 3, kind: input, shape index: {}]
  %s4 = inlined_call_operand.vmem [shape: f32[4,8,128], index: 4, kind: output, shape index: {0}]
  %s5 = inlined_call_operand.vmem [shape: f32[4,8,128], index: 5, kind: output, shape index: {1}]
  %6 = xla_tuple %s4, %s5
  %s7 = sld [smem:[#allocation0]]
  $region57: #{sparse_kernel_ft_forward.2} parent=0
    _
  %s9 = ssub.s32 1, %s7
  %s10 = scalar_select 0, %s9, %s7
  loop: start=0, step=1, limit=6
  $region2: #{sparse_kernel_ft_forward.2} parent=0 // loop_pre_header
    _
  $region3: #{sparse_kernel_ft_forward.2} parent=0 // loop_header
    %s12 = sphi 0, %s16
    %p13 = scmp.ge.s32.totalorder %s12, 6
    %s19 = sphi 0, %s31
    %s20 = sphi 0, %s27
    %s21 = sphi 0, %s19
    %s22 = sphi 0, %s20
    %s23 = sphi 0, %s21
    %s24 = sphi 0, %s22
    %s36 = sphi 0, %s38
    %s39 = sphi 0, %s36
    %s40 = sphi 0, %s39
    %s56 = sphi 0, %s40
    %s64 = sphi 0, %s66
    %s67 = sphi 0, %s64
    %s68 = sphi 0, %s67
    %s84 = sphi 0, %s68
    %s92 = sphi 0, %s94
    %s95 = sphi 0, %s92
    %s96 = sphi 0, %s95
    %s112 = sphi 0, %s96
    %s120 = sphi 0, %s122
    %s123 = sphi 0, %s120
    %s124 = sphi 0, %s123
    %s140 = sphi 0, %s124
    %s148 = sphi 0, %s150
    %s151 = sphi 0, %s148
    %s152 = sphi 0, %s151
    %s168 = sphi 0, %s152
    %s176 = sphi 0, %s178
    %s179 = sphi 0, %s176
    %s180 = sphi 0, %s179
    %s196 = sphi 0, %s180
  $region4: #{sparse_kernel_ft_forward.2} parent=0 // loop_header_branch
    %15 = sbr.rel (%p13) target = $region8
  $region5: #{sparse_kernel_ft_forward.2} parent=0 // loop_body
    %s17 = ssub.s32 %s12, 1
    %s18 = ssub.s32 %s12, 2
    %s25 = sadd.s32 1, %s20
    %p26 = scmp.ge.s32.totalorder %s25, 1
    %s27 = scalar_select %p26, 0, %s25
    %s28 = sadd.s32 1, %s19
    %s29 = scalar_select %p26, %s28, %s19
    %p30 = scmp.ge.s32.totalorder %s29, 4
    %s31 = scalar_select %p30, 0, %s29
    %s32 = ssub.s32 %s19, %s31
    %s33 = ssub.s32 %s20, %s27
    %s34 = sor.u32 %s32, %s33
    %p35 = scmp.eq.s32.totalorder %s34, 0
    %s37 = sadd.s32 %s36, 1
    %s38 = scalar_select %p35, %s36, %s37
    %p41 = pneg %p35
    %p42 = scmp.eq.s32.totalorder %s12, 3
    %p43 = por %p41, %p42
    %p44 = scmp.ne.s32.totalorder %s36, %s39
    %p45 = scmp.eq.s32.totalorder %s12, 0
    %p46 = por %p44, %p45
    %p47 = scmp.ne.s32.totalorder %s36, %s39
    %p48 = scmp.eq.s32.totalorder %s17, 3
    %p49 = por %p47, %p48
    %p50 = scmp.ne.s32.totalorder %s39, %s40
    %p51 = scmp.eq.s32.totalorder %s17, 0
    %p52 = por %p50, %p51
    %p53 = scmp.ne.s32.totalorder %s39, %s40
    %p54 = scmp.eq.s32.totalorder %s18, 3
    %p55 = por %p53, %p54
    %p57 = scmp.ne.s32.totalorder %s40, %s56
    %p58 = scmp.eq.s32.totalorder %s18, 0
    %p59 = por %p57, %p58
    %s60 = ssub.s32 %s19, %s31
    %s61 = ssub.s32 %s20, %s27
    %s62 = sor.u32 %s60, %s61
    %p63 = scmp.eq.s32.totalorder %s62, 0
    %s65 = sadd.s32 %s64, 1
    %s66 = scalar_select %p63, %s64, %s65
    %p69 = pneg %p63
    %p70 = scmp.eq.s32.totalorder %s12, 3
    %p71 = por %p69, %p70
    %p72 = scmp.ne.s32.totalorder %s64, %s67
    %p73 = scmp.eq.s32.totalorder %s12, 0
    %p74 = por %p72, %p73
    %p75 = scmp.ne.s32.totalorder %s64, %s67
    %p76 = scmp.eq.s32.totalorder %s17, 3
    %p77 = por %p75, %p76
    %p78 = scmp.ne.s32.totalorder %s67, %s68
    %p79 = scmp.eq.s32.totalorder %s17, 0
    %p80 = por %p78, %p79
    %p81 = scmp.ne.s32.totalorder %s67, %s68
    %p82 = scmp.eq.s32.totalorder %s18, 3
    %p83 = por %p81, %p82
    %p85 = scmp.ne.s32.totalorder %s68, %s84
    %p86 = scmp.eq.s32.totalorder %s18, 0
    %p87 = por %p85, %p86
    %s88 = ssub.s32 %s19, %s31
    %s89 = ssub.s32 %s20, %s27
    %s90 = sor.u32 %s88, %s89
    %p91 = scmp.eq.s32.totalorder %s90, 0
    %s93 = sadd.s32 %s92, 1
    %s94 = scalar_select %p91, %s92, %s93
    %p97 = pneg %p91
    %p98 = scmp.eq.s32.totalorder %s12, 3
    %p99 = por %p97, %p98
    %p100 = scmp.ne.s32.totalorder %s92, %s95
    %p101 = scmp.eq.s32.totalorder %s12, 0
    %p102 = por %p100, %p101
    %p103 = scmp.ne.s32.totalorder %s92, %s95
    %p104 = scmp.eq.s32.totalorder %s17, 3
    %p105 = por %p103, %p104
    %p106 = scmp.ne.s32.totalorder %s95, %s96
    %p107 = scmp.eq.s32.totalorder %s17, 0
    %p108 = por %p106, %p107
    %p109 = scmp.ne.s32.totalorder %s95, %s96
    %p110 = scmp.eq.s32.totalorder %s18, 3
    %p111 = por %p109, %p110
    %p113 = scmp.ne.s32.totalorder %s96, %s112
    %p114 = scmp.eq.s32.totalorder %s18, 0
    %p115 = por %p113, %p114
    %s116 = ssub.s32 %s19, %s31
    %s117 = ssub.s32 %s20, %s27
    %s118 = sor.u32 %s116, %s117
    %p119 = scmp.eq.s32.totalorder %s118, 0
    %s121 = sadd.s32 %s120, 1
    %s122 = scalar_select %p119, %s120, %s121
    %p125 = pneg %p119
    %p126 = scmp.eq.s32.totalorder %s12, 3
    %p127 = por %p125, %p126
    %p128 = scmp.ne.s32.totalorder %s120, %s123
    %p129 = scmp.eq.s32.totalorder %s12, 0
    %p130 = por %p128, %p129
    %p131 = scmp.ne.s32.totalorder %s120, %s123
    %p132 = scmp.eq.s32.totalorder %s17, 3
    %p133 = por %p131, %p132
    %p134 = scmp.ne.s32.totalorder %s123, %s124
    %p135 = scmp.eq.s32.totalorder %s17, 0
    %p136 = por %p134, %p135
    %p137 = scmp.ne.s32.totalorder %s123, %s124
    %p138 = scmp.eq.s32.totalorder %s18, 3
    %p139 = por %p137, %p138
    %p141 = scmp.ne.s32.totalorder %s124, %s140
    %p142 = scmp.eq.s32.totalorder %s18, 0
    %p143 = por %p141, %p142
    %s144 = ssub.s32 %s19, %s31
    %s145 = ssub.s32 %s20, %s27
    %s146 = sor.u32 %s144, %s145
    %p147 = scmp.eq.s32.totalorder %s146, 0
    %s149 = sadd.s32 %s148, 1
    %s150 = scalar_select %p147, %s148, %s149
    %p153 = pneg %p147
    %p154 = scmp.eq.s32.totalorder %s12, 3
    %p155 = por %p153, %p154
    %p156 = scmp.ne.s32.totalorder %s148, %s151
    %p157 = scmp.eq.s32.totalorder %s12, 0
    %p158 = por %p156, %p157
    %p159 = scmp.ne.s32.totalorder %s148, %s151
    %p160 = scmp.eq.s32.totalorder %s17, 3
    %p161 = por %p159, %p160
    %p162 = scmp.ne.s32.totalorder %s151, %s152
    %p163 = scmp.eq.s32.totalorder %s17, 0
    %p164 = por %p162, %p163
    %p165 = scmp.ne.s32.totalorder %s151, %s152
    %p166 = scmp.eq.s32.totalorder %s18, 3
    %p167 = por %p165, %p166
    %p169 = scmp.ne.s32.totalorder %s152, %s168
    %p170 = scmp.eq.s32.totalorder %s18, 0
    %p171 = por %p169, %p170
    %s172 = ssub.s32 %s19, %s31
    %s173 = ssub.s32 %s20, %s27
    %s174 = sor.u32 %s172, %s173
    %p175 = scmp.eq.s32.totalorder %s174, 0
    %s177 = sadd.s32 %s176, 1
    %s178 = scalar_select %p175, %s176, %s177
    %p181 = pneg %p175
    %p182 = scmp.eq.s32.totalorder %s12, 3
    %p183 = por %p181, %p182
    %p184 = scmp.ne.s32.totalorder %s176, %s179
    %p185 = scmp.eq.s32.totalorder %s12, 0
    %p186 = por %p184, %p185
    %p187 = scmp.ne.s32.totalorder %s176, %s179
    %p188 = scmp.eq.s32.totalorder %s17, 3
    %p189 = por %p187, %p188
    %p190 = scmp.ne.s32.totalorder %s179, %s180
    %p191 = scmp.eq.s32.totalorder %s17, 0
    %p192 = por %p190, %p191
    %p193 = scmp.ne.s32.totalorder %s179, %s180
    %p194 = scmp.eq.s32.totalorder %s18, 3
    %p195 = por %p193, %p194
    %p197 = scmp.ne.s32.totalorder %s180, %s196
    %p198 = scmp.eq.s32.totalorder %s18, 0
    %p199 = por %p197, %p198
    %p200 = scmp.le.s32.totalorder 1, %s12
    %p201 = scmp.lt.s32.totalorder %s12, 5
    %p202 = pnand %p200, %p201
    %p203 = pneg %p202
    // Predicated region
    $region9: #{sparse_kernel_ft_forward.2} parent=5 // pred_check
      _
    $region10: #{sparse_kernel_ft_forward.2} parent=5 // pred_check_branch
      %205 = sbr.rel (%p202) target = $region12
    $region11: #{sparse_kernel_ft_forward.2} parent=5 // pred_region
      %s206 = ssub.s32 %s12, 1
    $region12: #{sparse_kernel_ft_forward.2} parent=5 // pred_fallthru
      _
    %p207 = scmp.lt.s32.totalorder %s12, 4
    // Predicated region
    $region13: #{sparse_kernel_ft_forward.2} parent=5 // pred_check
      %p208 = pneg %p207
    $region14: #{sparse_kernel_ft_forward.2} parent=5 // pred_check_branch
      %210 = sbr.rel (%p208) target = $region16
    $region15: #{sparse_kernel_ft_forward.2} parent=5 // pred_region
      // Predicated region
      $region17: #{sparse_kernel_ft_forward.2} parent=15 // pred_check
        %p211 = pneg %p46
      $region18: #{sparse_kernel_ft_forward.2} parent=15 // pred_check_branch
        %213 = sbr.rel (%p211) target = $region20
      $region19: #{sparse_kernel_ft_forward.2} parent=15 // pred_region
        %p214 = scmp.lt.s32.totalorder %s19, 3
        %s215 = scalar_select %p214, %s19, 3
        %p216 = scmp.lt.s32.totalorder %s20, 0
        %s217 = scalar_select %p216, %s20, 0
        %s218 = smul.addr %s215, 2
        %s219 = sadd.s32 %s217, %s218
        %s220 = smul.addr %s219, 4
        %s221 = scalar_lea.vmem %s0, %s220
      $region20: #{sparse_kernel_ft_forward.2} parent=15 // pred_fallthru
        _
      // Predicated region
      $region21: #{sparse_kernel_ft_forward.2} parent=15 // pred_check
        %p222 = pneg %p74
      $region22: #{sparse_kernel_ft_forward.2} parent=15 // pred_check_branch
        %224 = sbr.rel (%p222) target = $region24
      $region23: #{sparse_kernel_ft_forward.2} parent=15 // pred_region
        %p225 = scmp.lt.s32.totalorder %s19, 3
        %s226 = scalar_select %p225, %s19, 3
        %p227 = scmp.lt.s32.totalorder %s20, 0
        %s228 = scalar_select %p227, %s20, 0
        %s229 = smul.addr %s226, 2
        %s230 = sadd.s32 %s228, %s229
        %s231 = smul.addr %s230, 4
        %s232 = scalar_lea.vmem %s1, %s231
      $region24: #{sparse_kernel_ft_forward.2} parent=15 // pred_fallthru
        _
      // Predicated region
      $region25: #{sparse_kernel_ft_forward.2} parent=15 // pred_check
        %p233 = pneg %p102
      $region26: #{sparse_kernel_ft_forward.2} parent=15 // pred_check_branch
        %235 = sbr.rel (%p233) target = $region28
      $region27: #{sparse_kernel_ft_forward.2} parent=15 // pred_region
        %p236 = scmp.lt.s32.totalorder %s19, 3
        %s237 = scalar_select %p236, %s19, 3
        %p238 = scmp.lt.s32.totalorder %s20, 0
        %s239 = scalar_select %p238, %s20, 0
        %s240 = smul.addr %s237, 4
        %s241 = sadd.s32 %s239, %s240
        %s242 = smul.addr %s241, 4
        %s243 = scalar_lea.vmem %s2, %s242
      $region28: #{sparse_kernel_ft_forward.2} parent=15 // pred_fallthru
        _
      // Predicated region
      $region29: #{sparse_kernel_ft_forward.2} parent=15 // pred_check
        %p244 = pneg %p130
      $region30: #{sparse_kernel_ft_forward.2} parent=15 // pred_check_branch
        %246 = sbr.rel (%p244) target = $region32
      $region31: #{sparse_kernel_ft_forward.2} parent=15 // pred_region
        %p247 = scmp.lt.s32.totalorder %s19, 3
        %s248 = scalar_select %p247, %s19, 3
        %p249 = scmp.lt.s32.totalorder %s20, 0
        %s250 = scalar_select %p249, %s20, 0
        %s251 = smul.addr %s248, 4
        %s252 = sadd.s32 %s250, %s251
        %s253 = smul.addr %s252, 4
        %s254 = scalar_lea.vmem %s3, %s253
      $region32: #{sparse_kernel_ft_forward.2} parent=15 // pred_fallthru
        _
    $region16: #{sparse_kernel_ft_forward.2} parent=5 // pred_fallthru
      _
    %p255 = scmp.le.s32.totalorder 1, %s12
    %p256 = scmp.lt.s32.totalorder %s12, 5
    %p257 = pnand %p255, %p256
    %p258 = pneg %p257
    // Predicated region
    $region33: #{sparse_kernel_ft_forward.2} parent=5 // pred_check
      _
    $region34: #{sparse_kernel_ft_forward.2} parent=5 // pred_check_branch
      %260 = sbr.rel (%p257) target = $region36
    $region35: #{sparse_kernel_ft_forward.2} parent=5 // pred_region
      %s261 = ssub.s32 %s12, 1
      %p262 = scmp.lt.s32.totalorder %s21, 3
      %s263 = scalar_select %p262, %s21, 3
      %p264 = scmp.lt.s32.totalorder %s22, 0
      %s265 = scalar_select %p264, %s22, 0
      %s266 = smul.addr %s263, 2
      %s267 = sadd.s32 %s265, %s266
      %s268 = smul.addr %s267, 4
      %s269 = scalar_lea.vmem %s0, %s268
      %p270 = pneg %p52
      %p271 = pneg %p49
      %p272 = scmp.lt.s32.totalorder %s21, 3
      %s273 = scalar_select %p272, %s21, 3
      %p274 = scmp.lt.s32.totalorder %s22, 0
      %s275 = scalar_select %p274, %s22, 0
      %s276 = smul.addr %s273, 2
      %s277 = sadd.s32 %s275, %s276
      %s278 = smul.addr %s277, 4
      %s279 = scalar_lea.vmem %s1, %s278
      %p280 = pneg %p80
      %p281 = pneg %p77
      %p282 = scmp.lt.s32.totalorder %s21, 3
      %s283 = scalar_select %p282, %s21, 3
      %p284 = scmp.lt.s32.totalorder %s22, 0
      %s285 = scalar_select %p284, %s22, 0
      %s286 = smul.addr %s283, 4
      %s287 = sadd.s32 %s285, %s286
      %s288 = smul.addr %s287, 4
      %s289 = scalar_lea.vmem %s2, %s288
      %p290 = pneg %p108
      %p291 = pneg %p105
      %p292 = scmp.lt.s32.totalorder %s21, 3
      %s293 = scalar_select %p292, %s21, 3
      %p294 = scmp.lt.s32.totalorder %s22, 0
      %s295 = scalar_select %p294, %s22, 0
      %s296 = smul.addr %s293, 4
      %s297 = sadd.s32 %s295, %s296
      %s298 = smul.addr %s297, 4
      %s299 = scalar_lea.vmem %s3, %s298
      %p300 = pneg %p136
      %p301 = pneg %p133
      %p302 = pneg %p164
      %p303 = pneg %p161
      %p304 = scmp.lt.s32.totalorder %s21, 3
      %s305 = scalar_select %p304, %s21, 3
      %p306 = scmp.lt.s32.totalorder %s22, 0
      %s307 = scalar_select %p306, %s22, 0
      %s308 = sadd.s32 %s307, %s305
      %s309 = smul.addr %s308, 8
      %s310 = scalar_lea.vmem %s4, %s309
      %p311 = pneg %p192
      %p312 = pneg %p189
      %p313 = scmp.lt.s32.totalorder %s21, 3
      %s314 = scalar_select %p313, %s21, 3
      %p315 = scmp.lt.s32.totalorder %s22, 0
      %s316 = scalar_select %p315, %s22, 0
      %s317 = sadd.s32 %s316, %s314
      %s318 = smul.addr %s317, 8
      %s319 = scalar_lea.vmem %s5, %s318
      %p320 = scmp.lt.s32.totalorder %s21, 3
      %s321 = scalar_select %p320, %s21, 3
      %p322 = scmp.lt.s32.totalorder %s22, 0
      %s323 = scalar_select %p322, %s22, 0
      %s324 = smul.addr %s321, 2
      %s325 = sadd.s32 %s323, %s324
      %s326 = smul.addr %s325, 4
      %s327 = scalar_lea.vmem %s0, %s326
      %p328 = scmp.lt.s32.totalorder %s21, 3
      %s329 = scalar_select %p328, %s21, 3
      %p330 = scmp.lt.s32.totalorder %s22, 0
      %s331 = scalar_select %p330, %s22, 0
      %s332 = smul.addr %s329, 2
      %s333 = sadd.s32 %s331, %s332
      %s334 = smul.addr %s333, 4
      %s335 = scalar_lea.vmem %s1, %s334
      %p336 = scmp.lt.s32.totalorder %s21, 3
      %s337 = scalar_select %p336, %s21, 3
      %p338 = scmp.lt.s32.totalorder %s22, 0
      %s339 = scalar_select %p338, %s22, 0
      %s340 = smul.addr %s337, 4
      %s341 = sadd.s32 %s339, %s340
      %s342 = smul.addr %s341, 4
      %s343 = scalar_lea.vmem %s2, %s342
      %p344 = scmp.lt.s32.totalorder %s21, 3
      %s345 = scalar_select %p344, %s21, 3
      %p346 = scmp.lt.s32.totalorder %s22, 0
      %s347 = scalar_select %p346, %s22, 0
      %s348 = smul.addr %s345, 4
      %s349 = sadd.s32 %s347, %s348
      %s350 = smul.addr %s349, 4
      %s351 = scalar_lea.vmem %s3, %s350
      %p352 = scmp.lt.s32.totalorder %s21, 3
      %s353 = scalar_select %p352, %s21, 3
      %p354 = scmp.lt.s32.totalorder %s22, 0
      %s355 = scalar_select %p354, %s22, 0
      %s356 = sadd.s32 %s355, %s353
      %s357 = smul.addr %s356, 8
      %s358 = scalar_lea.vmem %s4, %s357
      %p359 = scmp.lt.s32.totalorder %s21, 3
      %s360 = scalar_select %p359, %s21, 3
      %p361 = scmp.lt.s32.totalorder %s22, 0
      %s362 = scalar_select %p361, %s22, 0
      %s363 = sadd.s32 %s362, %s360
      %s364 = smul.addr %s363, 8
      %s365 = scalar_lea.vmem %s5, %s364
      %v366 = vld [vmem:[%s327] sm:$0x1]
      %v367 = vld [vmem:[%s327 + $0x4] sm:$0x1]
      %v368 = vlaneseq
      %v369 = vshrl.u32 %v368, 7
      %v370 = vsub.s32 0, %v369
      %v371 = vrot.slane %v366, %v370
      %v372 = vlaneseq
      %v373 = vshrl.u32 %v372, 7
      %v374 = vsub.s32 0, %v373
      %v375 = vrot.slane %v367, %v374
      %vm376 = vcmask 1043456
      %v377 = vsel %vm376, %v371, %v375
      %v378 = vld [vmem:[%s335] sm:$0x1]
      %v379 = vld [vmem:[%s335 + $0x4] sm:$0x1]
      %v380 = vlaneseq
      %v381 = vshrl.u32 %v380, 7
      %v382 = vsub.s32 0, %v381
      %v383 = vrot.slane %v378, %v382
      %v384 = vlaneseq
      %v385 = vshrl.u32 %v384, 7
      %v386 = vsub.s32 0, %v385
      %v387 = vrot.slane %v379, %v386
      %v388 = vsel %vm376, %v383, %v387
      %v389 = vld [vmem:[%s343] sm:$0xf]
      %v391 = vrot.slane %v389, 4
      %v393 = vsel %vm376, %v389, %v391
      %v394 = vld [vmem:[%s351] sm:$0xf]
      %v396 = vrot.slane %v394, 4
      %v398 = vsel %vm376, %v394, %v396
      %v399 = vadd.f32 %v377, %v388
      %v400 = vmul.f32 %v399, %v393
      %v401 = vsub.f32 %v398, %v393
      %v402 = vmul.f32 %v377, %v401
      %v403 = vadd.f32 %v393, %v398
      %v404 = vmul.f32 %v388, %v403
      %v405 = vsub.f32 %v400, %v404
      %406 = vst [vmem:[%s358] sm:$0xff] %v405
      %v407 = vadd.f32 %v400, %v402
      %408 = vst [vmem:[%s365] sm:$0xff] %v407
      %v409 = vld [vmem:[%s327 + $0x1] sm:$0x1]
      %v410 = vld [vmem:[%s327 + $0x5] sm:$0x1]
      %v411 = vlaneseq
      %v412 = vshrl.u32 %v411, 7
      %v413 = vsub.s32 0, %v412
      %v414 = vrot.slane %v409, %v413
      %v415 = vlaneseq
      %v416 = vshrl.u32 %v415, 7
      %v417 = vsub.s32 0, %v416
      %v418 = vrot.slane %v410, %v417
      %v419 = vsel %vm376, %v414, %v418
      %v420 = vld [vmem:[%s335 + $0x1] sm:$0x1]
      %v421 = vld [vmem:[%s335 + $0x5] sm:$0x1]
      %v422 = vlaneseq
      %v423 = vshrl.u32 %v422, 7
      %v424 = vsub.s32 0, %v423
      %v425 = vrot.slane %v420, %v424
      %v426 = vlaneseq
      %v427 = vshrl.u32 %v426, 7
      %v428 = vsub.s32 0, %v427
      %v429 = vrot.slane %v421, %v428
      %v430 = vsel %vm376, %v425, %v429
      %s431 = scalar_lea.vmem %s343, 4
      %v432 = vld [vmem:[%s431] sm:$0xf]
      %v434 = vrot.slane %v432, 4
      %v436 = vsel %vm376, %v432, %v434
      %s437 = scalar_lea.vmem %s351, 4
      %v438 = vld [vmem:[%s437] sm:$0xf]
      %v440 = vrot.slane %v438, 4
      %v442 = vsel %vm376, %v438, %v440
      %v443 = vadd.f32 %v419, %v430
      %v444 = vmul.f32 %v443, %v436
      %v445 = vsub.f32 %v442, %v436
      %v446 = vmul.f32 %v419, %v445
      %v447 = vadd.f32 %v436, %v442
      %v448 = vmul.f32 %v430, %v447
      %v449 = vld [vmem:[%s358] sm:$0xff]
      %v450 = vsub.f32 %v444, %v448
      %v451 = vadd.f32 %v449, %v450
      %452 = vst [vmem:[%s358] sm:$0xff] %v451
      %v453 = vld [vmem:[%s365] sm:$0xff]
      %v454 = vadd.f32 %v444, %v446
      %v455 = vadd.f32 %v453, %v454
      %456 = vst [vmem:[%s365] sm:$0xff] %v455
      %v457 = vld [vmem:[%s327 + $0x2] sm:$0x1]
      %v458 = vld [vmem:[%s327 + $0x6] sm:$0x1]
      %v459 = vlaneseq
      %v460 = vshrl.u32 %v459, 7
      %v461 = vsub.s32 0, %v460
      %v462 = vrot.slane %v457, %v461
      %v463 = vlaneseq
      %v464 = vshrl.u32 %v463, 7
      %v465 = vsub.s32 0, %v464
      %v466 = vrot.slane %v458, %v465
      %v467 = vsel %vm376, %v462, %v466
      %v468 = vld [vmem:[%s335 + $0x2] sm:$0x1]
      %v469 = vld [vmem:[%s335 + $0x6] sm:$0x1]
      %v470 = vlaneseq
      %v471 = vshrl.u32 %v470, 7
      %v472 = vsub.s32 0, %v471
      %v473 = vrot.slane %v468, %v472
      %v474 = vlaneseq
      %v475 = vshrl.u32 %v474, 7
      %v476 = vsub.s32 0, %v475
      %v477 = vrot.slane %v469, %v476
      %v478 = vsel %vm376, %v473, %v477
      %s479 = scalar_lea.vmem %s343, 8
      %v480 = vld [vmem:[%s479] sm:$0xf]
      %v482 = vrot.slane %v480, 4
      %v484 = vsel %vm376, %v480, %v482
      %s485 = scalar_lea.vmem %s351, 8
      %v486 = vld [vmem:[%s485] sm:$0xf]
      %v488 = vrot.slane %v486, 4
      %v490 = vsel %vm376, %v486, %v488
      %v491 = vadd.f32 %v467, %v478
      %v492 = vmul.f32 %v491, %v484
      %v493 = vsub.f32 %v490, %v484
      %v494 = vmul.f32 %v467, %v493
      %v495 = vadd.f32 %v484, %v490
      %v496 = vmul.f32 %v478, %v495
      %v497 = vld [vmem:[%s358] sm:$0xff]
      %v498 = vsub.f32 %v492, %v496
      %v499 = vadd.f32 %v497, %v498
      %500 = vst [vmem:[%s358] sm:$0xff] %v499
      %v501 = vld [vmem:[%s365] sm:$0xff]
      %v502 = vadd.f32 %v492, %v494
      %v503 = vadd.f32 %v501, %v502
      %504 = vst [vmem:[%s365] sm:$0xff] %v503
      %v505 = vld [vmem:[%s327 + $0x3] sm:$0x1]
      %v506 = vld [vmem:[%s327 + $0x7] sm:$0x1]
      %v507 = vlaneseq
      %v508 = vshrl.u32 %v507, 7
      %v509 = vsub.s32 0, %v508
      %v510 = vrot.slane %v505, %v509
      %v511 = vlaneseq
      %v512 = vshrl.u32 %v511, 7
      %v513 = vsub.s32 0, %v512
      %v514 = vrot.slane %v506, %v513
      %v515 = vsel %vm376, %v510, %v514
      %v516 = vld [vmem:[%s335 + $0x3] sm:$0x1]
      %v517 = vld [vmem:[%s335 + $0x7] sm:$0x1]
      %v518 = vlaneseq
      %v519 = vshrl.u32 %v518, 7
      %v520 = vsub.s32 0, %v519
      %v521 = vrot.slane %v516, %v520
      %v522 = vlaneseq
      %v523 = vshrl.u32 %v522, 7
      %v524 = vsub.s32 0, %v523
      %v525 = vrot.slane %v517, %v524
      %v526 = vsel %vm376, %v521, %v525
      %s527 = scalar_lea.vmem %s343, 12
      %v528 = vld [vmem:[%s527] sm:$0xf]
      %v530 = vrot.slane %v528, 4
      %v532 = vsel %vm376, %v528, %v530
      %s533 = scalar_lea.vmem %s351, 12
      %v534 = vld [vmem:[%s533] sm:$0xf]
      %v536 = vrot.slane %v534, 4
      %v538 = vsel %vm376, %v534, %v536
      %v539 = vadd.f32 %v515, %v526
      %v540 = vmul.f32 %v539, %v532
      %v541 = vsub.f32 %v538, %v532
      %v542 = vmul.f32 %v515, %v541
      %v543 = vadd.f32 %v532, %v538
      %v544 = vmul.f32 %v526, %v543
      %v545 = vld [vmem:[%s358] sm:$0xff]
      %v546 = vsub.f32 %v540, %v544
      %v547 = vadd.f32 %v545, %v546
      %548 = vst [vmem:[%s358] sm:$0xff] %v547
      %v549 = vld [vmem:[%s365] sm:$0xff]
      %v550 = vadd.f32 %v540, %v542
      %v551 = vadd.f32 %v549, %v550
      %552 = vst [vmem:[%s365] sm:$0xff] %v551
      %p553 = scmp.lt.s32.totalorder %s21, 3
      %s554 = scalar_select %p553, %s21, 3
      %p555 = scmp.lt.s32.totalorder %s22, 0
      %s556 = scalar_select %p555, %s22, 0
      %s557 = sadd.s32 %s556, %s554
      %s558 = smul.addr %s557, 8
      %s559 = scalar_lea.vmem %s4, %s558
      %p560 = scmp.lt.s32.totalorder %s21, 3
      %s561 = scalar_select %p560, %s21, 3
      %p562 = scmp.lt.s32.totalorder %s22, 0
      %s563 = scalar_select %p562, %s22, 0
      %s564 = sadd.s32 %s563, %s561
      %s565 = smul.addr %s564, 8
      %s566 = scalar_lea.vmem %s5, %s565
      // Predicated region
      $region37: #{sparse_kernel_ft_forward.2} parent=35 // pred_check
        %p567 = pneg %p161
      $region38: #{sparse_kernel_ft_forward.2} parent=35 // pred_check_branch
        %569 = sbr.rel (%p567) target = $region40
      $region39: #{sparse_kernel_ft_forward.2} parent=35 // pred_region
        _
      $region40: #{sparse_kernel_ft_forward.2} parent=35 // pred_fallthru
        _
      // Predicated region
      $region41: #{sparse_kernel_ft_forward.2} parent=35 // pred_check
        %p570 = pneg %p189
      $region42: #{sparse_kernel_ft_forward.2} parent=35 // pred_check_branch
        %572 = sbr.rel (%p570) target = $region44
      $region43: #{sparse_kernel_ft_forward.2} parent=35 // pred_region
        _
      $region44: #{sparse_kernel_ft_forward.2} parent=35 // pred_fallthru
        _
    $region36: #{sparse_kernel_ft_forward.2} parent=5 // pred_fallthru
      _
    %p573 = scmp.le.s32.totalorder 2, %s12
    // Predicated region
    $region45: #{sparse_kernel_ft_forward.2} parent=5 // pred_check
      %p574 = pneg %p573
    $region46: #{sparse_kernel_ft_forward.2} parent=5 // pred_check_branch
      %576 = sbr.rel (%p574) target = $region48
    $region47: #{sparse_kernel_ft_forward.2} parent=5 // pred_region
      %s577 = ssub.s32 %s12, 2
      // Predicated region
      $region49: #{sparse_kernel_ft_forward.2} parent=47 // pred_check
        %p578 = pneg %p167
      $region50: #{sparse_kernel_ft_forward.2} parent=47 // pred_check_branch
        %580 = sbr.rel (%p578) target = $region52
      $region51: #{sparse_kernel_ft_forward.2} parent=47 // pred_region
        %p581 = scmp.lt.s32.totalorder %s23, 3
        %s582 = scalar_select %p581, %s23, 3
        %p583 = scmp.lt.s32.totalorder %s24, 0
        %s584 = scalar_select %p583, %s24, 0
        %s585 = sadd.s32 %s584, %s582
        %s586 = smul.addr %s585, 8
        %s587 = scalar_lea.vmem %s4, %s586
      $region52: #{sparse_kernel_ft_forward.2} parent=47 // pred_fallthru
        _
      // Predicated region
      $region53: #{sparse_kernel_ft_forward.2} parent=47 // pred_check
        %p588 = pneg %p195
      $region54: #{sparse_kernel_ft_forward.2} parent=47 // pred_check_branch
        %590 = sbr.rel (%p588) target = $region56
      $region55: #{sparse_kernel_ft_forward.2} parent=47 // pred_region
        %p591 = scmp.lt.s32.totalorder %s23, 3
        %s592 = scalar_select %p591, %s23, 3
        %p593 = scmp.lt.s32.totalorder %s24, 0
        %s594 = scalar_select %p593, %s24, 0
        %s595 = sadd.s32 %s594, %s592
        %s596 = smul.addr %s595, 8
        %s597 = scalar_lea.vmem %s5, %s596
      $region56: #{sparse_kernel_ft_forward.2} parent=47 // pred_fallthru
        _
    $region48: #{sparse_kernel_ft_forward.2} parent=5 // pred_fallthru
      _
  $region6: #{sparse_kernel_ft_forward.2} parent=0 // loop_footer
    %s16 = sadd.s32 1, %s12
  $region7: #{sparse_kernel_ft_forward.2} parent=0 // loop_footer_branch
    %11 = sbr.rel target = $region3
  $region8: #{sparse_kernel_ft_forward.2} parent=0 // loop_exit
    _

// kernel: reverse.1
$region0: #{reverse.1}
  #allocation0 [shape = 's32[1]{0}', space=sflag, size = 0x4, scoped, tag = 'scoped memory for reverse.1']
  %s0 = inlined_call_operand.vmem [shape: f32[2,4,8,8,3], index: 0, kind: input, shape index: {}]
  %s1 = inlined_call_operand.vmem [shape: f32[2,4,8,8,3], index: 1, kind: output, shape index: {}]
  %s2 = scalar_lea.vmem %s0, 16
  %v3 = vld [vmem:[%s2] sm:$0xff]
  %4 = vst [vmem:[%s1] sm:$0xff] %v3
  %s5 = scalar_lea.vmem %s0, 112
  %v6 = vld [vmem:[%s5] sm:$0xff]
  %s7 = scalar_lea.vmem %s1, 96
  %8 = vst [vmem:[%s7] sm:$0xff] %v6
  %s9 = scalar_lea.vmem %s0, 40
  %v10 = vld [vmem:[%s9] sm:$0xff]
  %s11 = scalar_lea.vmem %s1, 24
  %12 = vst [vmem:[%s11] sm:$0xff] %v10
  %s13 = scalar_lea.vmem %s0, 136
  %v14 = vld [vmem:[%s13] sm:$0xff]
  %s15 = scalar_lea.vmem %s1, 120
  %16 = vst [vmem:[%s15] sm:$0xff] %v14
  %s17 = scalar_lea.vmem %s0, 64
  %v18 = vld [vmem:[%s17] sm:$0xff]
  %s19 = scalar_lea.vmem %s1, 48
  %20 = vst [vmem:[%s19] sm:$0xff] %v18
  %s21 = scalar_lea.vmem %s0, 160
  %v22 = vld [vmem:[%s21] sm:$0xff]
  %s23 = scalar_lea.vmem %s1, 144
  %24 = vst [vmem:[%s23] sm:$0xff] %v22
  %s25 = scalar_lea.vmem %s0, 88
  %v26 = vld [vmem:[%s25] sm:$0xff]
  %s27 = scalar_lea.vmem %s1, 72
  %28 = vst [vmem:[%s27] sm:$0xff] %v26
  %s29 = scalar_lea.vmem %s0, 184
  %v30 = vld [vmem:[%s29] sm:$0xff]
  %s31 = scalar_lea.vmem %s1, 168
  %32 = vst [vmem:[%s31] sm:$0xff] %v30
  %s33 = scalar_lea.vmem %s0, 8
  %v34 = vld [vmem:[%s33] sm:$0xff]
  %s35 = scalar_lea.vmem %s1, 8
  %36 = vst [vmem:[%s35] sm:$0xff] %v34
  %s37 = scalar_lea.vmem %s0, 104
  %v38 = vld [vmem:[%s37] sm:$0xff]
  %s39 = scalar_lea.vmem %s1, 104
  %40 = vst [vmem:[%s39] sm:$0xff] %v38
  %s41 = scalar_lea.vmem %s0, 32
  %v42 = vld [vmem:[%s41] sm:$0xff]
  %s43 = scalar_lea.vmem %s1, 32
  %44 = vst [vmem:[%s43] sm:$0xff] %v42
  %s45 = scalar_lea.vmem %s0, 128
  %v46 = vld [vmem:[%s45] sm:$0xff]
  %s47 = scalar_lea.vmem %s1, 128
  %48 = vst [vmem:[%s47] sm:$0xff] %v46
  %s49 = scalar_lea.vmem %s0, 56
  %v50 = vld [vmem:[%s49] sm:$0xff]
  %s51 = scalar_lea.vmem %s1, 56
  %52 = vst [vmem:[%s51] sm:$0xff] %v50
  %s53 = scalar_lea.vmem %s0, 152
  %v54 = vld [vmem:[%s53] sm:$0xff]
  %s55 = scalar_lea.vmem %s1, 152
  %56 = vst [vmem:[%s55] sm:$0xff] %v54
  %s57 = scalar_lea.vmem %s0, 80
  %v58 = vld [vmem:[%s57] sm:$0xff]
  %s59 = scalar_lea.vmem %s1, 80
  %60 = vst [vmem:[%s59] sm:$0xff] %v58
  %s61 = scalar_lea.vmem %s0, 176
  %v62 = vld [vmem:[%s61] sm:$0xff]
  %s63 = scalar_lea.vmem %s1, 176
  %64 = vst [vmem:[%s63] sm:$0xff] %v62
  %v65 = vld [vmem:[%s0] sm:$0xff]
  %s66 = scalar_lea.vmem %s1, 16
  %67 = vst [vmem:[%s66] sm:$0xff] %v65
  %s68 = scalar_lea.vmem %s0, 96
  %v69 = vld [vmem:[%s68] sm:$0xff]
  %s70 = scalar_lea.vmem %s1, 112
  %71 = vst [vmem:[%s70] sm:$0xff] %v69
  %s72 = scalar_lea.vmem %s0, 24
  %v73 = vld [vmem:[%s72] sm:$0xff]
  %s74 = scalar_lea.vmem %s1, 40
  %75 = vst [vmem:[%s74] sm:$0xff] %v73
  %s76 = scalar_lea.vmem %s0, 120
  %v77 = vld [vmem:[%s76] sm:$0xff]
  %s78 = scalar_lea.vmem %s1, 136
  %79 = vst [vmem:[%s78] sm:$0xff] %v77
  %s80 = scalar_lea.vmem %s0, 48
  %v81 = vld [vmem:[%s80] sm:$0xff]
  %s82 = scalar_lea.vmem %s1, 64
  %83 = vst [vmem:[%s82] sm:$0xff] %v81
  %s84 = scalar_lea.vmem %s0, 144
  %v85 = vld [vmem:[%s84] sm:$0xff]
  %s86 = scalar_lea.vmem %s1, 160
  %87 = vst [vmem:[%s86] sm:$0xff] %v85
  %s88 = scalar_lea.vmem %s0, 72
  %v89 = vld [vmem:[%s88] sm:$0xff]
  %s90 = scalar_lea.vmem %s1, 88
  %91 = vst [vmem:[%s90] sm:$0xff] %v89
  %s92 = scalar_lea.vmem %s0, 168
  %v93 = vld [vmem:[%s92] sm:$0xff]
  %s94 = scalar_lea.vmem %s1, 184
  %95 = vst [vmem:[%s94] sm:$0xff] %v93

// kernel: sparse_kernel_ft_forward.3
$region0: #{sparse_kernel_ft_forward.3}
  #allocation0 [shape = 'u32[]', space=smem, size = 0x4, offset = 0x4, fixed_abs, tag = 'smem constant byte address 0x4 - core index']
  #allocation1 [shape = 'u32[144,128]{1,0:T(1,128)}', space=vmem, size = 0x12000, scoped, tag = 'internal scratch']
  %s0 = inlined_call_operand.vmem [shape: f32[2,4,512], index: 0, kind: input, shape index: {}]
  %s1 = inlined_call_operand.vmem [shape: f32[4,4], index: 1, kind: input, shape index: {}]
  %s2 = inlined_call_operand.vmem [shape: f32[4,1], index: 2, kind: input, shape index: {}]
  %s3 = inlined_call_operand.vmem [shape: f32[2,4,512], index: 3, kind: output, shape index: {}]
  %s4 = sld [smem:[#allocation0]]
  $region45: #{sparse_kernel_ft_forward.3} parent=0
    _
  %s6 = ssub.s32 1, %s4
  %s7 = scalar_select 0, %s6, %s4
  loop: start=0, step=1, limit=4
  $region2: #{sparse_kernel_ft_forward.3} parent=0 // loop_pre_header
    _
  $region3: #{sparse_kernel_ft_forward.3} parent=0 // loop_header
    %s9 = sphi 0, %s13
    %p10 = scmp.ge.s32.totalorder %s9, 4
    %s16 = sphi 0, %s28
    %s17 = sphi 0, %s24
    %s18 = sphi 0, %s16
    %s19 = sphi 0, %s17
    %s20 = sphi 0, %s18
    %s21 = sphi 0, %s19
    %s33 = sphi 0, %s35
    %s36 = sphi 0, %s33
    %s37 = sphi 0, %s36
    %s53 = sphi 0, %s37
    %s57 = sphi 0, %s57
    %s59 = sphi 0, %s57
    %s60 = sphi 0, %s59
    %s74 = sphi 0, %s60
    %s78 = sphi 0, %s78
    %s80 = sphi 0, %s78
    %s81 = sphi 0, %s80
    %s95 = sphi 0, %s81
    %s103 = sphi 0, %s105
    %s106 = sphi 0, %s103
    %s107 = sphi 0, %s106
    %s123 = sphi 0, %s107
  $region4: #{sparse_kernel_ft_forward.3} parent=0 // loop_header_branch
    %12 = sbr.rel (%p10) target = $region8
  $region5: #{sparse_kernel_ft_forward.3} parent=0 // loop_body
    %s14 = ssub.s32 %s9, 1
    %s15 = ssub.s32 %s9, 2
    %s22 = sadd.s32 1, %s17
    %p23 = scmp.ge.s32.totalorder %s22, 1
    %s24 = scalar_select %p23, 0, %s22
    %s25 = sadd.s32 1, %s16
    %s26 = scalar_select %p23, %s25, %s16
    %p27 = scmp.ge.s32.totalorder %s26, 2
    %s28 = scalar_select %p27, 0, %s26
    %s29 = ssub.s32 %s16, %s28
    %s30 = ssub.s32 %s17, %s24
    %s31 = sor.u32 %s29, %s30
    %p32 = scmp.eq.s32.totalorder %s31, 0
    %s34 = sadd.s32 %s33, 1
    %s35 = scalar_select %p32, %s33, %s34
    %p38 = pneg %p32
    %p39 = scmp.eq.s32.totalorder %s9, 1
    %p40 = por %p38, %p39
    %p41 = scmp.ne.s32.totalorder %s33, %s36
    %p42 = scmp.eq.s32.totalorder %s9, 0
    %p43 = por %p41, %p42
    %p44 = scmp.ne.s32.totalorder %s33, %s36
    %p45 = scmp.eq.s32.totalorder %s14, 1
    %p46 = por %p44, %p45
    %p47 = scmp.ne.s32.totalorder %s36, %s37
    %p48 = scmp.eq.s32.totalorder %s14, 0
    %p49 = por %p47, %p48
    %p50 = scmp.ne.s32.totalorder %s36, %s37
    %p51 = scmp.eq.s32.totalorder %s15, 1
    %p52 = por %p50, %p51
    %p54 = scmp.ne.s32.totalorder %s37, %s53
    %p55 = scmp.eq.s32.totalorder %s15, 0
    %p56 = por %p54, %p55
    %s58 = sadd.s32 %s57, 1
    %p61 = scmp.eq.s32.totalorder %s9, 1
    %p62 = scmp.ne.s32.totalorder %s57, %s59
    %p63 = scmp.eq.s32.totalorder %s9, 0
    %p64 = por %p62, %p63
    %p65 = scmp.ne.s32.totalorder %s57, %s59
    %p66 = scmp.eq.s32.totalorder %s14, 1
    %p67 = por %p65, %p66
    %p68 = scmp.ne.s32.totalorder %s59, %s60
    %p69 = scmp.eq.s32.totalorder %s14, 0
    %p70 = por %p68, %p69
    %p71 = scmp.ne.s32.totalorder %s59, %s60
    %p72 = scmp.eq.s32.totalorder %s15, 1
    %p73 = por %p71, %p72
    %p75 = scmp.ne.s32.totalorder %s60, %s74
    %p76 = scmp.eq.s32.totalorder %s15, 0
    %p77 = por %p75, %p76
    %s79 = sadd.s32 %s78, 1
    %p82 = scmp.eq.s32.totalorder %s9, 1
    %p83 = scmp.ne.s32.totalorder %s78, %s80
    %p84 = scmp.eq.s32.totalorder %s9, 0
    %p85 = por %p83, %p84
    %p86 = scmp.ne.s32.totalorder %s78, %s80
    %p87 = scmp.eq.s32.totalorder %s14, 1
    %p88 = por %p86, %p87
    %p89 = scmp.ne.s32.totalorder %s80, %s81
    %p90 = scmp.eq.s32.totalorder %s14, 0
    %p91 = por %p89, %p90
    %p92 = scmp.ne.s32.totalorder %s80, %s81
    %p93 = scmp.eq.s32.totalorder %s15, 1
    %p94 = por %p92, %p93
    %p96 = scmp.ne.s32.totalorder %s81, %s95
    %p97 = scmp.eq.s32.totalorder %s15, 0
    %p98 = por %p96, %p97
    %s99 = ssub.s32 %s16, %s28
    %s100 = ssub.s32 %s17, %s24
    %s101 = sor.u32 %s99, %s100
    %p102 = scmp.eq.s32.totalorder %s101, 0
    %s104 = sadd.s32 %s103, 1
    %s105 = scalar_select %p102, %s103, %s104
    %p108 = pneg %p102
    %p109 = scmp.eq.s32.totalorder %s9, 1
    %p110 = por %p108, %p109
    %p111 = scmp.ne.s32.totalorder %s103, %s106
    %p112 = scmp.eq.s32.totalorder %s9, 0
    %p113 = por %p111, %p112
    %p114 = scmp.ne.s32.totalorder %s103, %s106
    %p115 = scmp.eq.s32.totalorder %s14, 1
    %p116 = por %p114, %p115
    %p117 = scmp.ne.s32.totalorder %s106, %s107
    %p118 = scmp.eq.s32.totalorder %s14, 0
    %p119 = por %p117, %p118
    %p120 = scmp.ne.s32.totalorder %s106, %s107
    %p121 = scmp.eq.s32.totalorder %s15, 1
    %p122 = por %p120, %p121
    %p124 = scmp.ne.s32.totalorder %s107, %s123
    %p125 = scmp.eq.s32.totalorder %s15, 0
    %p126 = por %p124, %p125
    %p127 = scmp.le.s32.totalorder 1, %s9
    %p128 = scmp.lt.s32.totalorder %s9, 3
    %p129 = pnand %p127, %p128
    %p130 = pneg %p129
    // Predicated region
    $region9: #{sparse_kernel_ft_forward.3} parent=5 // pred_check
      _
    $region10: #{sparse_kernel_ft_forward.3} parent=5 // pred_check_branch
      %132 = sbr.rel (%p129) target = $region12
    $region11: #{sparse_kernel_ft_forward.3} parent=5 // pred_region
      %s133 = ssub.s32 %s9, 1
      // Predicated region
      $region13: #{sparse_kernel_ft_forward.3} parent=11 // pred_check
        %p134 = pneg %p70
      $region14: #{sparse_kernel_ft_forward.3} parent=11 // pred_check_branch
        %136 = sbr.rel (%p134) target = $region16
      $region15: #{sparse_kernel_ft_forward.3} parent=11 // pred_region
        _
      $region16: #{sparse_kernel_ft_forward.3} parent=11 // pred_fallthru
        _
      // Predicated region
      $region17: #{sparse_kernel_ft_forward.3} parent=11 // pred_check
        %p137 = pneg %p91
      $region18: #{sparse_kernel_ft_forward.3} parent=11 // pred_check_branch
        %139 = sbr.rel (%p137) target = $region20
      $region19: #{sparse_kernel_ft_forward.3} parent=11 // pred_region
        _
      $region20: #{sparse_kernel_ft_forward.3} parent=11 // pred_fallthru
        _
    $region12: #{sparse_kernel_ft_forward.3} parent=5 // pred_fallthru
      _
    %p140 = scmp.lt.s32.totalorder %s9, 2
    // Predicated region
    $region21: #{sparse_kernel_ft_forward.3} parent=5 // pred_check
      %p141 = pneg %p140
    $region22: #{sparse_kernel_ft_forward.3} parent=5 // pred_check_branch
      %143 = sbr.rel (%p141) target = $region24
    $region23: #{sparse_kernel_ft_forward.3} parent=5 // pred_region
      // Predicated region
      $region25: #{sparse_kernel_ft_forward.3} parent=23 // pred_check
        %p144 = pneg %p43
      $region26: #{sparse_kernel_ft_forward.3} parent=23 // pred_check_branch
        %146 = sbr.rel (%p144) target = $region28
      $region27: #{sparse_kernel_ft_forward.3} parent=23 // pred_region
        %s147 = smul.u32 4, %s17
        %p148 = scmp.lt.s32.totalorder %s16, 1
        %s149 = scalar_select %p148, %s16, 1
        %p150 = scmp.lt.s32.totalorder %s147, 3
        %s151 = scalar_select %p150, %s147, 3
        %s152 = smul.addr %s149, 4
        %s153 = sadd.s32 %s151, %s152
        %s154 = smul.addr %s153, 4
        %s155 = scalar_lea.vmem %s0, %s154
        %s156 = smul.u32 4, %s17
      $region28: #{sparse_kernel_ft_forward.3} parent=23 // pred_fallthru
        _
    $region24: #{sparse_kernel_ft_forward.3} parent=5 // pred_fallthru
      _
    %p157 = scmp.le.s32.totalorder 1, %s9
    %p158 = scmp.lt.s32.totalorder %s9, 3
    %p159 = pnand %p157, %p158
    %p160 = pneg %p159
    // Predicated region
    $region29: #{sparse_kernel_ft_forward.3} parent=5 // pred_check
      _
    $region30: #{sparse_kernel_ft_forward.3} parent=5 // pred_check_branch
      %162 = sbr.rel (%p159) target = $region32
    $region31: #{sparse_kernel_ft_forward.3} parent=5 // pred_region
      %s163 = ssub.s32 %s9, 1
      %s164 = smul.u32 4, %s19
      %p165 = scmp.lt.s32.totalorder %s18, 1
      %s166 = scalar_select %p165, %s18, 1
      %p167 = scmp.lt.s32.totalorder %s164, 3
      %s168 = scalar_select %p167, %s164, 3
      %s169 = smul.addr %s166, 4
      %s170 = sadd.s32 %s168, %s169
      %s171 = smul.addr %s170, 4
      %s172 = scalar_lea.vmem %s0, %s171
      %p173 = pneg %p49
      %p174 = pneg %p46
      %p175 = pneg %p70
      %p176 = pneg %p67
      %p177 = pneg %p91
      %p178 = pneg %p88
      %p179 = pneg %p119
      %p180 = pneg %p116
      %s181 = smul.u32 4, %s19
      %p182 = scmp.lt.s32.totalorder %s18, 1
      %s183 = scalar_select %p182, %s18, 1
      %p184 = scmp.lt.s32.totalorder %s181, 3
      %s185 = scalar_select %p184, %s181, 3
      %s186 = smul.addr %s183, 4
      %s187 = sadd.s32 %s185, %s186
      %s188 = smul.addr %s187, 4
      %s189 = scalar_lea.vmem %s3, %s188
      %s190 = smul.u32 4, %s19
      %p191 = scmp.lt.s32.totalorder %s18, 1
      %s192 = scalar_select %p191, %s18, 1
      %p193 = scmp.lt.s32.totalorder %s190, 3
      %s194 = scalar_select %p193, %s190, 3
      %s195 = smul.addr %s192, 4
      %s196 = sadd.s32 %s194, %s195
      %s197 = smul.addr %s196, 4
      %s198 = scalar_lea.vmem %s0, %s197
      %s199 = smul.u32 4, %s19
      %s200 = smul.u32 4, %s19
      %p201 = scmp.lt.s32.totalorder %s18, 1
      %s202 = scalar_select %p201, %s18, 1
      %p203 = scmp.lt.s32.totalorder %s200, 3
      %s204 = scalar_select %p203, %s200, 3
      %s205 = smul.addr %s202, 4
      %s206 = sadd.s32 %s204, %s205
      %s207 = smul.addr %s206, 4
      %s208 = scalar_lea.vmem %s3, %s207
      %s209 = smul.u32 4, %s19
      %v210 = vld [vmem:[%s198] sm:$0xff]
      %v211 = vld [vmem:[%s198 + $0x8] sm:$0xff]
      %v212 = vmax.f32 %v210, 0.0
      %v213 = vmax.f32 %v211, 0.0
      %v214 = vld [vmem:[%s1] sm:$0xf]
      %216 = vset.pattern.permute.xlu0 0
      %217 = vperm.xlu0 %216, %v214
      %v218 = vpop.permute.xlu0 %217
      %v222 = vlaneseq
      %v223 = vshrl.u32 %v222, 7
      %v224 = vsub.s32 0, %v223
      %v225 = vrot.slane %v212, %v224
      %v226 = vlaneseq
      %v227 = vshrl.u32 %v226, 7
      %v228 = vsub.s32 4, %v227
      %v229 = vrot.slane %v212, %v228
      %v230 = vlaneseq
      %v231 = vshrl.u32 %v230, 7
      %v232 = vsub.s32 0, %v231
      %v233 = vrot.slane %v213, %v232
      %v234 = vlaneseq
      %v235 = vshrl.u32 %v234, 7
      %v236 = vsub.s32 4, %v235
      %v237 = vrot.slane %v213, %v236
      %v242 = vlaneseq
      %v243 = vshrl.u32 %v242, 7
      %v244 = vsub.s32 0, %v243
      %v245 = vrot.slane %v225, %v244
      %v246 = vlaneseq
      %v247 = vshrl.u32 %v246, 7
      %v248 = vsub.s32 0, %v247
      %v249 = vrot.slane %v229, %v248
      %v250 = vlaneseq
      %v251 = vshrl.u32 %v250, 7
      %v252 = vsub.s32 0, %v251
      %v253 = vrot.slane %v233, %v252
      %v254 = vlaneseq
      %v255 = vshrl.u32 %v254, 7
      %v256 = vsub.s32 0, %v255
      %v257 = vrot.slane %v237, %v256
      %v258 = vmul.f32 %v218, %v245
      %v259 = vmul.f32 %v218, %v249
      %v260 = vmul.f32 %v218, %v253
      %v261 = vmul.f32 %v218, %v257
      %262 = vset.pattern.permute.xlu0 1
      %263 = vperm.xlu0 %262, %v214
      %v264 = vpop.permute.xlu0 %263
      %v266 = vlaneseq
      %v267 = vshrl.u32 %v266, 7
      %v268 = vsub.s32 1, %v267
      %v269 = vrot.slane %v212, %v268
      %v270 = vlaneseq
      %v271 = vshrl.u32 %v270, 7
      %v272 = vsub.s32 5, %v271
      %v273 = vrot.slane %v212, %v272
      %v274 = vlaneseq
      %v275 = vshrl.u32 %v274, 7
      %v276 = vsub.s32 1, %v275
      %v277 = vrot.slane %v213, %v276
      %v278 = vlaneseq
      %v279 = vshrl.u32 %v278, 7
      %v280 = vsub.s32 5, %v279
      %v281 = vrot.slane %v213, %v280
      %v286 = vlaneseq
      %v287 = vshrl.u32 %v286, 7
      %v288 = vsub.s32 1, %v287
      %v289 = vrot.slane %v269, %v288
      %v290 = vlaneseq
      %v291 = vshrl.u32 %v290, 7
      %v292 = vsub.s32 1, %v291
      %v293 = vrot.slane %v273, %v292
      %v294 = vlaneseq
      %v295 = vshrl.u32 %v294, 7
      %v296 = vsub.s32 1, %v295
      %v297 = vrot.slane %v277, %v296
      %v298 = vlaneseq
      %v299 = vshrl.u32 %v298, 7
      %v300 = vsub.s32 1, %v299
      %v301 = vrot.slane %v281, %v300
      %v302 = vmul.f32 %v264, %v289
      %v303 = vmul.f32 %v264, %v293
      %v304 = vmul.f32 %v264, %v297
      %v305 = vmul.f32 %v264, %v301
      %v306 = vadd.f32 %v258, %v302
      %v307 = vadd.f32 %v259, %v303
      %v308 = vadd.f32 %v260, %v304
      %v309 = vadd.f32 %v261, %v305
      %310 = vset.pattern.permute.xlu0 2
      %311 = vperm.xlu0 %310, %v214
      %v312 = vpop.permute.xlu0 %311
      %v314 = vlaneseq
      %v315 = vshrl.u32 %v314, 7
      %v316 = vsub.s32 2, %v315
      %v317 = vrot.slane %v212, %v316
      %v318 = vlaneseq
      %v319 = vshrl.u32 %v318, 7
      %v320 = vsub.s32 6, %v319
      %v321 = vrot.slane %v212, %v320
      %v322 = vlaneseq
      %v323 = vshrl.u32 %v322, 7
      %v324 = vsub.s32 2, %v323
      %v325 = vrot.slane %v213, %v324
      %v326 = vlaneseq
      %v327 = vshrl.u32 %v326, 7
      %v328 = vsub.s32 6, %v327
      %v329 = vrot.slane %v213, %v328
      %v334 = vlaneseq
      %v335 = vshrl.u32 %v334, 7
      %v336 = vsub.s32 2, %v335
      %v337 = vrot.slane %v317, %v336
      %v338 = vlaneseq
      %v339 = vshrl.u32 %v338, 7
      %v340 = vsub.s32 2, %v339
      %v341 = vrot.slane %v321, %v340
      %v342 = vlaneseq
      %v343 = vshrl.u32 %v342, 7
      %v344 = vsub.s32 2, %v343
      %v345 = vrot.slane %v325, %v344
      %v346 = vlaneseq
      %v347 = vshrl.u32 %v346, 7
      %v348 = vsub.s32 2, %v347
      %v349 = vrot.slane %v329, %v348
      %v350 = vmul.f32 %v312, %v337
      %v351 = vmul.f32 %v312, %v341
      %v352 = vmul.f32 %v312, %v345
      %v353 = vmul.f32 %v312, %v349
      %v354 = vadd.f32 %v306, %v350
      %v355 = vadd.f32 %v307, %v351
      %v356 = vadd.f32 %v308, %v352
      %v357 = vadd.f32 %v309, %v353
      %358 = vset.pattern.permute.xlu0 3
      %359 = vperm.xlu0 %358, %v214
      %v360 = vpop.permute.xlu0 %359
      %v362 = vlaneseq
      %v363 = vshrl.u32 %v362, 7
      %v364 = vsub.s32 3, %v363
      %v365 = vrot.slane %v212, %v364
      %v366 = vlaneseq
      %v367 = vshrl.u32 %v366, 7
      %v368 = vsub.s32 7, %v367
      %v369 = vrot.slane %v212, %v368
      %v370 = vlaneseq
      %v371 = vshrl.u32 %v370, 7
      %v372 = vsub.s32 3, %v371
      %v373 = vrot.slane %v213, %v372
      %v374 = vlaneseq
      %v375 = vshrl.u32 %v374, 7
      %v376 = vsub.s32 7, %v375
      %v377 = vrot.slane %v213, %v376
      %v382 = vlaneseq
      %v383 = vshrl.u32 %v382, 7
      %v384 = vsub.s32 3, %v383
      %v385 = vrot.slane %v365, %v384
      %v386 = vlaneseq
      %v387 = vshrl.u32 %v386, 7
      %v388 = vsub.s32 3, %v387
      %v389 = vrot.slane %v369, %v388
      %v390 = vlaneseq
      %v391 = vshrl.u32 %v390, 7
      %v392 = vsub.s32 3, %v391
      %v393 = vrot.slane %v373, %v392
      %v394 = vlaneseq
      %v395 = vshrl.u32 %v394, 7
      %v396 = vsub.s32 3, %v395
      %v397 = vrot.slane %v377, %v396
      %v398 = vmul.f32 %v360, %v385
      %v399 = vmul.f32 %v360, %v389
      %v400 = vmul.f32 %v360, %v393
      %v401 = vmul.f32 %v360, %v397
      %v402 = vadd.f32 %v354, %v398
      %v403 = vadd.f32 %v355, %v399
      %v404 = vadd.f32 %v356, %v400
      %v405 = vadd.f32 %v357, %v401
      %v406 = vld [vmem:[%s2] sm:$0xf]
      %408 = vset.pattern.permute.xlu0 0
      %409 = vperm.xlu0 %408, %v406
      %v410 = vpop.permute.xlu0 %409
      %v412 = vadd.f32 %v402, %v410
      %v413 = vadd.f32 %v403, %v410
      %v414 = vadd.f32 %v404, %v410
      %v415 = vadd.f32 %v405, %v410
      %v420 = vcombine.low %v412, %v413
      %v421 = vcombine.low %v414, %v415
      %424 = vst [vmem:[%s208] sm:$0xff] %v420
      %425 = vst [vmem:[%s208 + $0x8] sm:$0xff] %v421
      %s426 = smul.u32 4, %s19
      %p427 = scmp.lt.s32.totalorder %s18, 1
      %s428 = scalar_select %p427, %s18, 1
      %p429 = scmp.lt.s32.totalorder %s426, 3
      %s430 = scalar_select %p429, %s426, 3
      %s431 = smul.addr %s428, 4
      %s432 = sadd.s32 %s430, %s431
      %s433 = smul.addr %s432, 4
      %s434 = scalar_lea.vmem %s3, %s433
      // Predicated region
      $region33: #{sparse_kernel_ft_forward.3} parent=31 // pred_check
        %p435 = pneg %p116
      $region34: #{sparse_kernel_ft_forward.3} parent=31 // pred_check_branch
        %437 = sbr.rel (%p435) target = $region36
      $region35: #{sparse_kernel_ft_forward.3} parent=31 // pred_region
        %s438 = smul.u32 4, %s19
      $region36: #{sparse_kernel_ft_forward.3} parent=31 // pred_fallthru
        _
    $region32: #{sparse_kernel_ft_forward.3} parent=5 // pred_fallthru
      _
    %p439 = scmp.le.s32.totalorder 2, %s9
    // Predicated region
    $region37: #{sparse_kernel_ft_forward.3} parent=5 // pred_check
      %p440 = pneg %p439
    $region38: #{sparse_kernel_ft_forward.3} parent=5 // pred_check_branch
      %442 = sbr.rel (%p440) target = $region40
    $region39: #{sparse_kernel_ft_forward.3} parent=5 // pred_region
      %s443 = ssub.s32 %s9, 2
      // Predicated region
      $region41: #{sparse_kernel_ft_forward.3} parent=39 // pred_check
        %p444 = pneg %p122
      $region42: #{sparse_kernel_ft_forward.3} parent=39 // pred_check_branch
        %446 = sbr.rel (%p444) target = $region44
      $region43: #{sparse_kernel_ft_forward.3} parent=39 // pred_region
        %s447 = smul.u32 4, %s21
        %p448 = scmp.lt.s32.totalorder %s20, 1
        %s449 = scalar_select %p448, %s20, 1
        %p450 = scmp.lt.s32.totalorder %s447, 3
        %s451 = scalar_select %p450, %s447, 3
        %s452 = smul.addr %s449, 4
        %s453 = sadd.s32 %s451, %s452
        %s454 = smul.addr %s453, 4
        %s455 = scalar_lea.vmem %s3, %s454
      $region44: #{sparse_kernel_ft_forward.3} parent=39 // pred_fallthru
        _
    $region40: #{sparse_kernel_ft_forward.3} parent=5 // pred_fallthru
      _
  $region6: #{sparse_kernel_ft_forward.3} parent=0 // loop_footer
    %s13 = sadd.s32 1, %s9
  $region7: #{sparse_kernel_ft_forward.3} parent=0 // loop_footer_branch
    %8 = sbr.rel target = $region3
  $region8: #{sparse_kernel_ft_forward.3} parent=0 // loop_exit
    _

</llo_original>
